<compile_context>
chip_gen: v7x
topology: tpu7x:2x2x1
jax: 0.10.0
libtpu: 0.0.40
codegen_flags: <defaults>
</compile_context>

<pallas_src>
import math

import jax
import jax.numpy as jnp
from jax import lax
from jax.experimental import pallas as pl
from jax.experimental.pallas import tpu as pltpu

# ---- small, BERT-like synthetic config (bert-base is 768/12/12; scaled down) ----
VOCAB = 64
TYPE_VOCAB = 2
MAX_POS = 16
HIDDEN = 32
N_LAYERS = 2
N_HEADS = 2
HEAD_DIM = HIDDEN // N_HEADS
INTERMEDIATE = 64
NUM_TAGS = 5
LN_EPS = 1e-12
LANE_PAD = 128            # classifier output padded to a full lane width
B = 2
S = 8

_INV_SQRT_D = 1.0 / math.sqrt(HEAD_DIM)


# ----------------------------- in-kernel helpers ---------------------------

def _ln(x, g, b):
    # f32 LayerNorm over the lane (feature) axis
    mean = jnp.mean(x, axis=-1, keepdims=True)
    var = jnp.mean((x - mean) ** 2, axis=-1, keepdims=True)
    return (x - mean) * lax.rsqrt(var + LN_EPS) * g + b


def _mm(a, w_bf16):
    # [M, K] f32 activation @ [K, N] bf16 weight, f32 accumulation on the MXU
    return lax.dot_general(a.astype(jnp.bfloat16), w_bf16,
                           dimension_numbers=(((1,), (0,)), ((), ())),
                           preferred_element_type=jnp.float32)


# ----------------------------- fused kernel --------------------------------
# One grid step = (one batch item, one encoder layer).  x is carried in VMEM
# scratch across the layer axis; the pooler/classifier run only at the last layer.

def _bert_kernel(emb_ref, mask_ref, emb_g_ref, emb_b_ref,
                 wqkv_ref, bqkv_ref, wo_ref, bo_ref,
                 wi_ref, bi_ref, wf_ref, bf_ref,
                 ln1g_ref, ln1b_ref, ln2g_ref, ln2b_ref,
                 pw_ref, pb_ref, cw_ref, cb_ref,
                 out_ref, x_ref):
    li = pl.program_id(1)

    @pl.when(li == 0)
    def _():
        # embedding LayerNorm seeds the carried hidden state for this batch row
        x_ref[...] = _ln(emb_ref[...], emb_g_ref[...], emb_b_ref[...])

    x = x_ref[...]                                                  # (S, H) f32

    # ---- fused, head-batched QKV projection --------------------------------
    # wqkv: (3*NH, H, D) bf16 -> one batched MXU pass -> qkv: (3*NH, S, D) f32.
    xb = jnp.broadcast_to(x.astype(jnp.bfloat16), (3 * N_HEADS,) + x.shape)
    qkv = jnp.einsum('nsh,nhd->nsd', xb, wqkv_ref[...],
                     preferred_element_type=jnp.float32) + bqkv_ref[...]
    q = qkv[0:N_HEADS]                       # (NH, S, D); 1/sqrt(D) folded at init
    k = qkv[N_HEADS:2 * N_HEADS]
    v = qkv[2 * N_HEADS:3 * N_HEADS]

    # ---- attention: all heads batched, no lane slices / concatenates -------
    s = jnp.einsum('nsd,ntd->nst', q.astype(jnp.bfloat16), k.astype(jnp.bfloat16),
                   preferred_element_type=jnp.float32)              # (NH, S, S)
    s = s + mask_ref[...][:, None, :]                               # additive key mask
    s = s - jnp.max(s, axis=-1, keepdims=True)
    p = jnp.exp(s)
    # TODO(synk): approx EUP reciprocal -> ~1e-3 rel err vs exact softmax division.
    p = p * pl.reciprocal(jnp.sum(p, axis=-1, keepdims=True), approx=True)
    ctx = jnp.einsum('nst,ntd->nsd', p.astype(jnp.bfloat16), v.astype(jnp.bfloat16),
                     preferred_element_type=jnp.float32)            # (NH, S, D)

    # head re-merge absorbed into the output projection: (NH,S,D)@(NH,D,H) then sum heads
    attn = jnp.einsum('nsd,ndh->nsh', ctx.astype(jnp.bfloat16), wo_ref[...],
                      preferred_element_type=jnp.float32).sum(axis=0) + bo_ref[...]
    h1 = _ln(attn + x, ln1g_ref[...], ln1b_ref[...])

    # ---- feed-forward + residual + LayerNorm --------------------------------
    # TODO(synk): HF BERT uses exact erf GELU; tanh approximation used here.
    ff = jax.nn.gelu(_mm(h1, wi_ref[...]) + bi_ref[...], approximate=True)
    ff = _mm(ff, wf_ref[...]) + bf_ref[...]
    x_new = _ln(ff + h1, ln2g_ref[...], ln2b_ref[...])
    x_ref[...] = x_new

    # ---- pooler + classifier on the [CLS] row (lane-dense padded output) ----
    @pl.when(li == pl.num_programs(1) - 1)
    def _():
        # TODO(synk): dropout(p=0.3) omitted; nn.Dropout is identity at eval.
        cls = x_new[0:1, :]                                         # (1, H)
        pooled = jnp.tanh(_mm(cls, pw_ref[...]) + pb_ref[...])
        out_ref[...] = (_mm(pooled, cw_ref[...]) + cb_ref[...]).astype(out_ref.dtype)


# ----------------------------- params --------------------------------------

def init_params(key):
    keys = jax.random.split(key, 5 + N_LAYERS)

    def dense(k, fan_in, fan_out):
        w = jax.random.normal(k, (fan_in, fan_out), jnp.float32) * 0.02
        b = jnp.zeros((1, fan_out), jnp.float32)
        return w, b

    params = {
        "word_emb": jax.random.normal(keys[0], (VOCAB, HIDDEN), jnp.float32) * 0.02,
        "pos_emb": jax.random.normal(keys[1], (MAX_POS, HIDDEN), jnp.float32) * 0.02,
        "type_emb": jax.random.normal(keys[2], (TYPE_VOCAB, HIDDEN), jnp.float32) * 0.02,
        "emb_ln_g": jnp.ones((1, HIDDEN), jnp.float32),
        "emb_ln_b": jnp.zeros((1, HIDDEN), jnp.float32),
    }

    wqkv, bqkv, wo, bo, wi, bi, wf, bff = [], [], [], [], [], [], [], []
    ln1g, ln1b, ln2g, ln2b = [], [], [], []
    for li in range(N_LAYERS):
        lk = jax.random.split(keys[5 + li], 4)
        w_qkv, b_qkv = dense(lk[0], HIDDEN, 3 * HIDDEN)      # fused [Wq | Wk | Wv]
        w_o, b_o = dense(lk[1], HIDDEN, HIDDEN)
        w_i, b_i = dense(lk[2], HIDDEN, INTERMEDIATE)
        w_f, b_f = dense(lk[3], INTERMEDIATE, HIDDEN)

        # head-structured QKV layout: (3*NH, H, D); fold 1/sqrt(D) into Q weights/bias
        w_h = (w_qkv.reshape(HIDDEN, 3, N_HEADS, HEAD_DIM)
               .transpose(1, 2, 0, 3).reshape(3 * N_HEADS, HIDDEN, HEAD_DIM))
        b_h = b_qkv.reshape(3, N_HEADS, 1, HEAD_DIM).reshape(3 * N_HEADS, 1, HEAD_DIM)
        w_h = w_h.at[:N_HEADS].multiply(_INV_SQRT_D)
        b_h = b_h.at[:N_HEADS].multiply(_INV_SQRT_D)
        # head-structured output projection: (NH, D, H)
        w_oh = w_o.reshape(N_HEADS, HEAD_DIM, HIDDEN)

        wqkv.append(w_h);  bqkv.append(b_h)
        wo.append(w_oh);   bo.append(b_o)
        wi.append(w_i);    bi.append(b_i)
        wf.append(w_f);    bff.append(b_f)
        ln1g.append(jnp.ones((1, HIDDEN), jnp.float32))
        ln1b.append(jnp.zeros((1, HIDDEN), jnp.float32))
        ln2g.append(jnp.ones((1, HIDDEN), jnp.float32))
        ln2b.append(jnp.zeros((1, HIDDEN), jnp.float32))

    # matmul weights stored in bf16 (less HBM->VMEM DMA, no per-matmul casts)
    params["wqkv"] = jnp.stack(wqkv).astype(jnp.bfloat16)   # (L, 3*NH, H, D)
    params["bqkv"] = jnp.stack(bqkv)                        # (L, 3*NH, 1, D) f32
    params["wo"] = jnp.stack(wo).astype(jnp.bfloat16)       # (L, NH, D, H)
    params["bo"] = jnp.stack(bo)                            # (L, 1, H)
    params["wi"] = jnp.stack(wi).astype(jnp.bfloat16)       # (L, H, I)
    params["bi"] = jnp.stack(bi)                            # (L, 1, I)
    params["wf"] = jnp.stack(wf).astype(jnp.bfloat16)       # (L, I, H)
    params["bf"] = jnp.stack(bff)                           # (L, 1, H)
    params["ln1_g"] = jnp.stack(ln1g); params["ln1_b"] = jnp.stack(ln1b)
    params["ln2_g"] = jnp.stack(ln2g); params["ln2_b"] = jnp.stack(ln2b)

    w_p, b_p = dense(keys[3], HIDDEN, HIDDEN)
    params["pool_w"] = w_p.astype(jnp.bfloat16)
    params["pool_b"] = b_p
    # classifier padded to a full 128-lane output (wrapper slices NUM_TAGS)
    w_c, b_c = dense(keys[4], HIDDEN, NUM_TAGS)
    params["clf_w"] = (jnp.zeros((HIDDEN, LANE_PAD), jnp.float32)
                       .at[:, :NUM_TAGS].set(w_c)).astype(jnp.bfloat16)
    params["clf_b"] = jnp.zeros((1, LANE_PAD), jnp.float32).at[:, :NUM_TAGS].set(b_c)
    return params


# ----------------------------- forward -------------------------------------

@jax.jit
def bert_ml_clf2_forward(params, token_ids, attention_masks, token_type_ids):
    Bz, Sz = token_ids.shape
    pos_ids = jnp.arange(Sz)

    # embedding gather + sum is glue (tiny, data-dependent gather)
    emb = (params["word_emb"][token_ids]
           + params["pos_emb"][pos_ids][None, :, :]
           + params["type_emb"][token_type_ids])                       # (B, S, H) f32

    # HF-style additive attention mask: 0 keep, -1e4 masked
    add_mask = ((1.0 - attention_masks.astype(jnp.float32)) * -10000.0
                ).reshape(Bz, 1, Sz)                                   # (B, 1, S)

    args = (emb, add_mask,
            params["emb_ln_g"], params["emb_ln_b"],
            params["wqkv"], params["bqkv"], params["wo"], params["bo"],
            params["wi"], params["bi"], params["wf"], params["bf"],
            params["ln1_g"], params["ln1_b"], params["ln2_g"], params["ln2_b"],
            params["pool_w"], params["pool_b"], params["clf_w"], params["clf_b"])

    def batch_spec(a):        # per-batch activation, indexed by grid axis 0
        nd = a.ndim
        return pl.BlockSpec((None,) + a.shape[1:],
                            lambda b, li, _nd=nd: (b,) + (0,) * (_nd - 1))

    def layer_spec(a):        # stacked per-layer params, streamed along grid axis 1
        nd = a.ndim
        return pl.BlockSpec((None,) + a.shape[1:],
                            lambda b, li, _nd=nd: (li,) + (0,) * (_nd - 1))

    def shared_spec(a):       # small params shared by every grid step
        nd = a.ndim
        return pl.BlockSpec(a.shape, lambda b, li, _nd=nd: (0,) * _nd)

    in_specs = [batch_spec(emb), batch_spec(add_mask),
                shared_spec(params["emb_ln_g"]), shared_spec(params["emb_ln_b"])]
    in_specs += [layer_spec(params[n]) for n in
                 ("wqkv", "bqkv", "wo", "bo", "wi", "bi", "wf", "bf",
                  "ln1_g", "ln1_b", "ln2_g", "ln2_b")]
    in_specs += [shared_spec(params[n]) for n in
                 ("pool_w", "pool_b", "clf_w", "clf_b")]

    out_padded = pl.pallas_call(
        _bert_kernel,
        out_shape=jax.ShapeDtypeStruct((Bz, 1, LANE_PAD), jnp.float32),
        grid=(Bz, N_LAYERS),
        in_specs=in_specs,
        out_specs=pl.BlockSpec((None, 1, LANE_PAD), lambda b, li: (b, 0, 0)),
        scratch_shapes=[pltpu.VMEM((Sz, HIDDEN), jnp.float32)],   # carried hidden state
        compiler_params=pltpu.CompilerParams(
            dimension_semantics=("parallel", "arbitrary"),
            vmem_limit_bytes=32 * 1024 * 1024),
    )(*args)
    return out_padded[:, 0, :NUM_TAGS]


if __name__ == "__main__":
    key = jax.random.PRNGKey(0)
    pkey, dkey = jax.random.split(key)
    params = init_params(pkey)

    token_ids = jax.random.randint(dkey, (B, S), 0, VOCAB, dtype=jnp.int32)
    attention_masks = jnp.ones((B, S), jnp.int32).at[1, 6:].set(0)  # pad last 2 of seq 1
    token_type_ids = jnp.zeros((B, S), jnp.int32)

    logits = bert_ml_clf2_forward(params, token_ids, attention_masks, token_type_ids)
    logits = jax.block_until_ready(logits)
    assert logits.shape == (B, NUM_TAGS) and logits.dtype == jnp.float32
    print("KERNEL_OK")
</pallas_src>

<mosaic_0001>
module attributes {stable_mosaic.version = 11 : i64} {
  func.func @_bert_kernel(%arg0: i32, %arg1: i32, %arg2: memref<1x8x32xf32, #tpu.memory_space<vmem>>, %arg3: memref<1x1x8xf32, #tpu.memory_space<vmem>>, %arg4: memref<1x32xf32, #tpu.memory_space<vmem>>, %arg5: memref<1x32xf32, #tpu.memory_space<vmem>>, %arg6: memref<1x6x32x16xbf16, #tpu.memory_space<vmem>>, %arg7: memref<1x6x1x16xf32, #tpu.memory_space<vmem>>, %arg8: memref<1x2x16x32xbf16, #tpu.memory_space<vmem>>, %arg9: memref<1x1x32xf32, #tpu.memory_space<vmem>>, %arg10: memref<1x32x64xbf16, #tpu.memory_space<vmem>>, %arg11: memref<1x1x64xf32, #tpu.memory_space<vmem>>, %arg12: memref<1x64x32xbf16, #tpu.memory_space<vmem>>, %arg13: memref<1x1x32xf32, #tpu.memory_space<vmem>>, %arg14: memref<1x1x32xf32, #tpu.memory_space<vmem>>, %arg15: memref<1x1x32xf32, #tpu.memory_space<vmem>>, %arg16: memref<1x1x32xf32, #tpu.memory_space<vmem>>, %arg17: memref<1x1x32xf32, #tpu.memory_space<vmem>>, %arg18: memref<32x32xbf16, #tpu.memory_space<vmem>>, %arg19: memref<1x32xf32, #tpu.memory_space<vmem>>, %arg20: memref<32x128xbf16, #tpu.memory_space<vmem>>, %arg21: memref<1x128xf32, #tpu.memory_space<vmem>>, %arg22: memref<1x1x128xf32, #tpu.memory_space<vmem>>, %arg23: memref<8x32xf32, #tpu.memory_space<vmem>>) attributes {dimension_semantics = [#tpu.dimension_semantics<parallel>, #tpu.dimension_semantics<arbitrary>], iteration_bounds = array<i64: 2, 2>, scalar_prefetch = 0 : i64, scratch_operands = 1 : i64, tpu.core_type = #tpu.core_type<tc>, window_params = [{transform_indices = @transform_0, window_bounds = array<i64: 1, 8, 32>}, {transform_indices = @transform_1, window_bounds = array<i64: 1, 1, 8>}, {pipeline_mode = #tpu.pipeline_mode<synchronous>, transform_indices = @transform_2, window_bounds = array<i64: 1, 32>}, {pipeline_mode = #tpu.pipeline_mode<synchronous>, transform_indices = @transform_3, window_bounds = array<i64: 1, 32>}, {transform_indices = @transform_4, window_bounds = array<i64: 1, 6, 32, 16>}, {transform_indices = @transform_5, window_bounds = array<i64: 1, 6, 1, 16>}, {transform_indices = @transform_6, window_bounds = array<i64: 1, 2, 16, 32>}, {transform_indices = @transform_7, window_bounds = array<i64: 1, 1, 32>}, {transform_indices = @transform_8, window_bounds = array<i64: 1, 32, 64>}, {transform_indices = @transform_9, window_bounds = array<i64: 1, 1, 64>}, {transform_indices = @transform_10, window_bounds = array<i64: 1, 64, 32>}, {transform_indices = @transform_11, window_bounds = array<i64: 1, 1, 32>}, {transform_indices = @transform_12, window_bounds = array<i64: 1, 1, 32>}, {transform_indices = @transform_13, window_bounds = array<i64: 1, 1, 32>}, {transform_indices = @transform_14, window_bounds = array<i64: 1, 1, 32>}, {transform_indices = @transform_15, window_bounds = array<i64: 1, 1, 32>}, {pipeline_mode = #tpu.pipeline_mode<synchronous>, transform_indices = @transform_16, window_bounds = array<i64: 32, 32>}, {pipeline_mode = #tpu.pipeline_mode<synchronous>, transform_indices = @transform_17, window_bounds = array<i64: 1, 32>}, {pipeline_mode = #tpu.pipeline_mode<synchronous>, transform_indices = @transform_18, window_bounds = array<i64: 32, 128>}, {pipeline_mode = #tpu.pipeline_mode<synchronous>, transform_indices = @transform_19, window_bounds = array<i64: 1, 128>}, {transform_indices = @transform_20, window_bounds = array<i64: 1, 1, 128>}]} {
    %c0_i32 = arith.constant 0 : i32
    %0 = arith.cmpi eq, %arg1, %c0_i32 : i32
    %1 = arith.extui %0 : i1 to i32
    %c0_i32_0 = arith.constant 0 : i32
    %2 = arith.cmpi ne, %1, %c0_i32_0 : i32
    scf.if %2 {
      %c0_69 = arith.constant 0 : index
      %c0_70 = arith.constant 0 : index
      %c0_71 = arith.constant 0 : index
      %134 = vector.load %arg2[%c0_69, %c0_70, %c0_71] : memref<1x8x32xf32, #tpu.memory_space<vmem>>, vector<1x8x32xf32>
      %135 = vector.shape_cast %134 : vector<1x8x32xf32> to vector<8x32xf32>
      %c0_72 = arith.constant 0 : index
      %c0_73 = arith.constant 0 : index
      %136 = vector.load %arg4[%c0_72, %c0_73] : memref<1x32xf32, #tpu.memory_space<vmem>>, vector<1x32xf32>
      %c0_74 = arith.constant 0 : index
      %c0_75 = arith.constant 0 : index
      %137 = vector.load %arg5[%c0_74, %c0_75] : memref<1x32xf32, #tpu.memory_space<vmem>>, vector<1x32xf32>
      %cst_76 = arith.constant dense<0.000000e+00> : vector<8xf32>
      %138 = vector.multi_reduction <add>, %135, %cst_76 [1] : vector<8x32xf32> to vector<8xf32>
      %139 = vector.shape_cast %138 : vector<8xf32> to vector<8x1xf32>
      %cst_77 = arith.constant 3.200000e+01 : f32
      %140 = vector.broadcast %cst_77 : f32 to vector<8x1xf32>
      %141 = arith.divf %139, %140 : vector<8x1xf32>
      %142 = vector.broadcast %141 : vector<8x1xf32> to vector<8x32xf32>
      %143 = arith.subf %135, %142 : vector<8x32xf32>
      %144 = arith.mulf %143, %143 : vector<8x32xf32>
      %cst_78 = arith.constant dense<0.000000e+00> : vector<8xf32>
      %145 = vector.multi_reduction <add>, %144, %cst_78 [1] : vector<8x32xf32> to vector<8xf32>
      %146 = vector.shape_cast %145 : vector<8xf32> to vector<8x1xf32>
      %cst_79 = arith.constant 3.200000e+01 : f32
      %147 = vector.broadcast %cst_79 : f32 to vector<8x1xf32>
      %148 = arith.divf %146, %147 : vector<8x1xf32>
      %149 = vector.broadcast %141 : vector<8x1xf32> to vector<8x32xf32>
      %150 = arith.subf %135, %149 : vector<8x32xf32>
      %cst_80 = arith.constant 9.99999996E-13 : f32
      %151 = vector.broadcast %cst_80 : f32 to vector<8x1xf32>
      %152 = arith.addf %148, %151 : vector<8x1xf32>
      %153 = math.rsqrt %152 : vector<8x1xf32>
      %154 = vector.broadcast %153 : vector<8x1xf32> to vector<8x32xf32>
      %155 = arith.mulf %150, %154 : vector<8x32xf32>
      %156 = vector.broadcast %136 : vector<1x32xf32> to vector<8x32xf32>
      %157 = arith.mulf %155, %156 : vector<8x32xf32>
      %158 = vector.broadcast %137 : vector<1x32xf32> to vector<8x32xf32>
      %159 = arith.addf %157, %158 : vector<8x32xf32>
      %c0_81 = arith.constant 0 : index
      %c0_82 = arith.constant 0 : index
      %160 = vector.load %arg23[%c0_81, %c0_82] : memref<8x32xf32, #tpu.memory_space<vmem>>, vector<8x32xf32>
      tpu.vector_store %arg23[%c0_81, %c0_82], %159 {strides = array<i32>} : memref<8x32xf32, #tpu.memory_space<vmem>>, vector<8x32xf32>,
    } else {
    }
    %c0 = arith.constant 0 : index
    %c0_1 = arith.constant 0 : index
    %3 = vector.load %arg23[%c0, %c0_1] : memref<8x32xf32, #tpu.memory_space<vmem>>, vector<8x32xf32>
    %4 = arith.truncf %3 : vector<8x32xf32> to vector<8x32xbf16>
    %5 = vector.shape_cast %4 : vector<8x32xbf16> to vector<1x8x32xbf16>
    %6 = vector.broadcast %5 : vector<1x8x32xbf16> to vector<6x8x32xbf16>
    %c0_2 = arith.constant 0 : index
    %c0_3 = arith.constant 0 : index
    %c0_4 = arith.constant 0 : index
    %c0_5 = arith.constant 0 : index
    %7 = vector.load %arg6[%c0_2, %c0_3, %c0_4, %c0_5] : memref<1x6x32x16xbf16, #tpu.memory_space<vmem>>, vector<1x6x32x16xbf16>
    %8 = vector.shape_cast %7 : vector<1x6x32x16xbf16> to vector<6x32x16xbf16>
    "tpu.trace_start"() <{level = 10 : i32, message = "nsh,nhd->nsd"}> : () -> ()
    %cst = arith.constant dense<0.000000e+00> : vector<6x8x16xf32>
    %9 = tpu.matmul %6, %8, %cst {dimension_numbers = #tpu.dot_dimension_numbers<[2], [1], [1], [2], [0, 0, 0, 1, 1, 2], [0], [0]>} : vector<6x8x32xbf16>, vector<6x32x16xbf16>, vector<6x8x16xf32> -> vector<6x8x16xf32>
    "tpu.trace_stop"() : () -> ()
    %c0_6 = arith.constant 0 : index
    %c0_7 = arith.constant 0 : index
    %c0_8 = arith.constant 0 : index
    %c0_9 = arith.constant 0 : index
    %10 = vector.load %arg7[%c0_6, %c0_7, %c0_8, %c0_9] : memref<1x6x1x16xf32, #tpu.memory_space<vmem>>, vector<1x6x1x16xf32>
    %11 = vector.shape_cast %10 : vector<1x6x1x16xf32> to vector<6x1x16xf32>
    %12 = vector.broadcast %11 : vector<6x1x16xf32> to vector<6x8x16xf32>
    %13 = arith.addf %9, %12 : vector<6x8x16xf32>
    %14 = vector.extract_strided_slice %13 {offsets = [0, 0, 0], sizes = [2, 8, 16], strides = [1, 1, 1]} : vector<6x8x16xf32> to vector<2x8x16xf32>
    %15 = vector.extract_strided_slice %13 {offsets = [2, 0, 0], sizes = [2, 8, 16], strides = [1, 1, 1]} : vector<6x8x16xf32> to vector<2x8x16xf32>
    %16 = vector.extract_strided_slice %13 {offsets = [4, 0, 0], sizes = [2, 8, 16], strides = [1, 1, 1]} : vector<6x8x16xf32> to vector<2x8x16xf32>
    %17 = arith.truncf %14 : vector<2x8x16xf32> to vector<2x8x16xbf16>
    %18 = arith.truncf %15 : vector<2x8x16xf32> to vector<2x8x16xbf16>
    "tpu.trace_start"() <{level = 10 : i32, message = "nsd,ntd->nst"}> : () -> ()
    %cst_10 = arith.constant dense<0.000000e+00> : vector<2x8x8xf32>
    %19 = tpu.matmul %17, %18, %cst_10 {dimension_numbers = #tpu.dot_dimension_numbers<[2], [2], [1], [1], [0, 0, 0, 1, 1, 1], [0], [0]>} : vector<2x8x16xbf16>, vector<2x8x16xbf16>, vector<2x8x8xf32> -> vector<2x8x8xf32>
    "tpu.trace_stop"() : () -> ()
    %c0_11 = arith.constant 0 : index
    %c0_12 = arith.constant 0 : index
    %c0_13 = arith.constant 0 : index
    %20 = vector.load %arg3[%c0_11, %c0_12, %c0_13] : memref<1x1x8xf32, #tpu.memory_space<vmem>>, vector<1x1x8xf32>
    %21 = vector.shape_cast %20 : vector<1x1x8xf32> to vector<1x8xf32>
    %22 = vector.shape_cast %21 : vector<1x8xf32> to vector<1x1x8xf32>
    %23 = vector.broadcast %22 : vector<1x1x8xf32> to vector<2x8x8xf32>
    %24 = arith.addf %19, %23 : vector<2x8x8xf32>
    %cst_14 = arith.constant dense<0xFF800000> : vector<2x8xf32>
    %25 = vector.multi_reduction <maximumf>, %24, %cst_14 [2] : vector<2x8x8xf32> to vector<2x8xf32>
    %26 = vector.shape_cast %25 : vector<2x8xf32> to vector<2x8x1xf32>
    %27 = vector.broadcast %26 : vector<2x8x1xf32> to vector<2x8x8xf32>
    %28 = arith.subf %24, %27 : vector<2x8x8xf32>
    %29 = math.exp %28 : vector<2x8x8xf32>
    %cst_15 = arith.constant dense<0.000000e+00> : vector<2x8xf32>
    %30 = vector.multi_reduction <add>, %29, %cst_15 [2] : vector<2x8x8xf32> to vector<2x8xf32>
    %31 = vector.shape_cast %30 : vector<2x8xf32> to vector<2x8x1xf32>
    %32 = tpu.reciprocal %31 {approx = true} : vector<2x8x1xf32> -> vector<2x8x1xf32>
    %33 = vector.broadcast %32 : vector<2x8x1xf32> to vector<2x8x8xf32>
    %34 = arith.mulf %29, %33 : vector<2x8x8xf32>
    %35 = arith.truncf %34 : vector<2x8x8xf32> to vector<2x8x8xbf16>
    %36 = arith.truncf %16 : vector<2x8x16xf32> to vector<2x8x16xbf16>
    "tpu.trace_start"() <{level = 10 : i32, message = "nst,ntd->nsd"}> : () -> ()
    %cst_16 = arith.constant dense<0.000000e+00> : vector<2x8x16xf32>
    %37 = tpu.matmul %35, %36, %cst_16 {dimension_numbers = #tpu.dot_dimension_numbers<[2], [1], [1], [2], [0, 0, 0, 1, 1, 2], [0], [0]>} : vector<2x8x8xbf16>, vector<2x8x16xbf16>, vector<2x8x16xf32> -> vector<2x8x16xf32>
    "tpu.trace_stop"() : () -> ()
    %38 = arith.truncf %37 : vector<2x8x16xf32> to vector<2x8x16xbf16>
    %c0_17 = arith.constant 0 : index
    %c0_18 = arith.constant 0 : index
    %c0_19 = arith.constant 0 : index
    %c0_20 = arith.constant 0 : index
    %39 = vector.load %arg8[%c0_17, %c0_18, %c0_19, %c0_20] : memref<1x2x16x32xbf16, #tpu.memory_space<vmem>>, vector<1x2x16x32xbf16>
    %40 = vector.shape_cast %39 : vector<1x2x16x32xbf16> to vector<2x16x32xbf16>
    "tpu.trace_start"() <{level = 10 : i32, message = "nsd,ndh->nsh"}> : () -> ()
    %cst_21 = arith.constant dense<0.000000e+00> : vector<2x8x32xf32>
    %41 = tpu.matmul %38, %40, %cst_21 {dimension_numbers = #tpu.dot_dimension_numbers<[2], [1], [1], [2], [0, 0, 0, 1, 1, 2], [0], [0]>} : vector<2x8x16xbf16>, vector<2x16x32xbf16>, vector<2x8x32xf32> -> vector<2x8x32xf32>
    "tpu.trace_stop"() : () -> ()
    %cst_22 = arith.constant dense<0.000000e+00> : vector<8x32xf32>
    %42 = vector.multi_reduction <add>, %41, %cst_22 [0] : vector<2x8x32xf32> to vector<8x32xf32>
    %c0_23 = arith.constant 0 : index
    %c0_24 = arith.constant 0 : index
    %c0_25 = arith.constant 0 : index
    %43 = vector.load %arg9[%c0_23, %c0_24, %c0_25] : memref<1x1x32xf32, #tpu.memory_space<vmem>>, vector<1x1x32xf32>
    %44 = vector.shape_cast %43 : vector<1x1x32xf32> to vector<1x32xf32>
    %45 = vector.broadcast %44 : vector<1x32xf32> to vector<8x32xf32>
    %46 = arith.addf %42, %45 : vector<8x32xf32>
    %47 = arith.addf %46, %3 : vector<8x32xf32>
    %c0_26 = arith.constant 0 : index
    %c0_27 = arith.constant 0 : index
    %c0_28 = arith.constant 0 : index
    %48 = vector.load %arg14[%c0_26, %c0_27, %c0_28] : memref<1x1x32xf32, #tpu.memory_space<vmem>>, vector<1x1x32xf32>
    %49 = vector.shape_cast %48 : vector<1x1x32xf32> to vector<1x32xf32>
    %c0_29 = arith.constant 0 : index
    %c0_30 = arith.constant 0 : index
    %c0_31 = arith.constant 0 : index
    %50 = vector.load %arg15[%c0_29, %c0_30, %c0_31] : memref<1x1x32xf32, #tpu.memory_space<vmem>>, vector<1x1x32xf32>
    %51 = vector.shape_cast %50 : vector<1x1x32xf32> to vector<1x32xf32>
    %cst_32 = arith.constant dense<0.000000e+00> : vector<8xf32>
    %52 = vector.multi_reduction <add>, %47, %cst_32 [1] : vector<8x32xf32> to vector<8xf32>
    %53 = vector.shape_cast %52 : vector<8xf32> to vector<8x1xf32>
    %cst_33 = arith.constant 3.200000e+01 : f32
    %54 = vector.broadcast %cst_33 : f32 to vector<8x1xf32>
    %55 = arith.divf %53, %54 : vector<8x1xf32>
    %56 = vector.broadcast %55 : vector<8x1xf32> to vector<8x32xf32>
    %57 = arith.subf %47, %56 : vector<8x32xf32>
    %58 = arith.mulf %57, %57 : vector<8x32xf32>
    %cst_34 = arith.constant dense<0.000000e+00> : vector<8xf32>
    %59 = vector.multi_reduction <add>, %58, %cst_34 [1] : vector<8x32xf32> to vector<8xf32>
    %60 = vector.shape_cast %59 : vector<8xf32> to vector<8x1xf32>
    %cst_35 = arith.constant 3.200000e+01 : f32
    %61 = vector.broadcast %cst_35 : f32 to vector<8x1xf32>
    %62 = arith.divf %60, %61 : vector<8x1xf32>
    %63 = vector.broadcast %55 : vector<8x1xf32> to vector<8x32xf32>
    %64 = arith.subf %47, %63 : vector<8x32xf32>
    %cst_36 = arith.constant 9.99999996E-13 : f32
    %65 = vector.broadcast %cst_36 : f32 to vector<8x1xf32>
    %66 = arith.addf %62, %65 : vector<8x1xf32>
    %67 = math.rsqrt %66 : vector<8x1xf32>
    %68 = vector.broadcast %67 : vector<8x1xf32> to vector<8x32xf32>
    %69 = arith.mulf %64, %68 : vector<8x32xf32>
    %70 = vector.broadcast %49 : vector<1x32xf32> to vector<8x32xf32>
    %71 = arith.mulf %69, %70 : vector<8x32xf32>
    %72 = vector.broadcast %51 : vector<1x32xf32> to vector<8x32xf32>
    %73 = arith.addf %71, %72 : vector<8x32xf32>
    %c0_37 = arith.constant 0 : index
    %c0_38 = arith.constant 0 : index
    %c0_39 = arith.constant 0 : index
    %74 = vector.load %arg10[%c0_37, %c0_38, %c0_39] : memref<1x32x64xbf16, #tpu.memory_space<vmem>>, vector<1x32x64xbf16>
    %75 = vector.shape_cast %74 : vector<1x32x64xbf16> to vector<32x64xbf16>
    %76 = arith.truncf %73 : vector<8x32xf32> to vector<8x32xbf16>
    %cst_40 = arith.constant dense<0.000000e+00> : vector<8x64xf32>
    %77 = tpu.matmul %76, %75, %cst_40 {dimension_numbers = #tpu.dot_dimension_numbers<[1], [0], [0], [1], [0, 0, 1, 1], [], []>} : vector<8x32xbf16>, vector<32x64xbf16>, vector<8x64xf32> -> vector<8x64xf32>
    %c0_41 = arith.constant 0 : index
    %c0_42 = arith.constant 0 : index
    %c0_43 = arith.constant 0 : index
    %78 = vector.load %arg11[%c0_41, %c0_42, %c0_43] : memref<1x1x64xf32, #tpu.memory_space<vmem>>, vector<1x1x64xf32>
    %79 = vector.shape_cast %78 : vector<1x1x64xf32> to vector<1x64xf32>
    %80 = vector.broadcast %79 : vector<1x64xf32> to vector<8x64xf32>
    %81 = arith.addf %77, %80 : vector<8x64xf32>
    %82 = arith.mulf %81, %81 : vector<8x64xf32>
    %83 = arith.mulf %81, %82 : vector<8x64xf32>
    %cst_44 = arith.constant 4.471500e-02 : f32
    %84 = vector.broadcast %cst_44 : f32 to vector<8x64xf32>
    %85 = arith.mulf %84, %83 : vector<8x64xf32>
    %86 = arith.addf %81, %85 : vector<8x64xf32>
    %cst_45 = arith.constant 0.797884583 : f32
    %87 = vector.broadcast %cst_45 : f32 to vector<8x64xf32>
    %88 = arith.mulf %87, %86 : vector<8x64xf32>
    %89 = math.tanh %88 : vector<8x64xf32>
    %cst_46 = arith.constant 1.000000e+00 : f32
    %90 = vector.broadcast %cst_46 : f32 to vector<8x64xf32>
    %91 = arith.addf %90, %89 : vector<8x64xf32>
    %cst_47 = arith.constant 5.000000e-01 : f32
    %92 = vector.broadcast %cst_47 : f32 to vector<8x64xf32>
    %93 = arith.mulf %92, %91 : vector<8x64xf32>
    %94 = arith.mulf %81, %93 : vector<8x64xf32>
    %c0_48 = arith.constant 0 : index
    %c0_49 = arith.constant 0 : index
    %c0_50 = arith.constant 0 : index
    %95 = vector.load %arg12[%c0_48, %c0_49, %c0_50] : memref<1x64x32xbf16, #tpu.memory_space<vmem>>, vector<1x64x32xbf16>
    %96 = vector.shape_cast %95 : vector<1x64x32xbf16> to vector<64x32xbf16>
    %97 = arith.truncf %94 : vector<8x64xf32> to vector<8x64xbf16>
    %cst_51 = arith.constant dense<0.000000e+00> : vector<8x32xf32>
    %98 = tpu.matmul %97, %96, %cst_51 {dimension_numbers = #tpu.dot_dimension_numbers<[1], [0], [0], [1], [0, 0, 1, 1], [], []>} : vector<8x64xbf16>, vector<64x32xbf16>, vector<8x32xf32> -> vector<8x32xf32>
    %c0_52 = arith.constant 0 : index
    %c0_53 = arith.constant 0 : index
    %c0_54 = arith.constant 0 : index
    %99 = vector.load %arg13[%c0_52, %c0_53, %c0_54] : memref<1x1x32xf32, #tpu.memory_space<vmem>>, vector<1x1x32xf32>
    %100 = vector.shape_cast %99 : vector<1x1x32xf32> to vector<1x32xf32>
    %101 = vector.broadcast %100 : vector<1x32xf32> to vector<8x32xf32>
    %102 = arith.addf %98, %101 : vector<8x32xf32>
    %103 = arith.addf %102, %73 : vector<8x32xf32>
    %c0_55 = arith.constant 0 : index
    %c0_56 = arith.constant 0 : index
    %c0_57 = arith.constant 0 : index
    %104 = vector.load %arg16[%c0_55, %c0_56, %c0_57] : memref<1x1x32xf32, #tpu.memory_space<vmem>>, vector<1x1x32xf32>
    %105 = vector.shape_cast %104 : vector<1x1x32xf32> to vector<1x32xf32>
    %c0_58 = arith.constant 0 : index
    %c0_59 = arith.constant 0 : index
    %c0_60 = arith.constant 0 : index
    %106 = vector.load %arg17[%c0_58, %c0_59, %c0_60] : memref<1x1x32xf32, #tpu.memory_space<vmem>>, vector<1x1x32xf32>
    %107 = vector.shape_cast %106 : vector<1x1x32xf32> to vector<1x32xf32>
    %cst_61 = arith.constant dense<0.000000e+00> : vector<8xf32>
    %108 = vector.multi_reduction <add>, %103, %cst_61 [1] : vector<8x32xf32> to vector<8xf32>
    %109 = vector.shape_cast %108 : vector<8xf32> to vector<8x1xf32>
    %cst_62 = arith.constant 3.200000e+01 : f32
    %110 = vector.broadcast %cst_62 : f32 to vector<8x1xf32>
    %111 = arith.divf %109, %110 : vector<8x1xf32>
    %112 = vector.broadcast %111 : vector<8x1xf32> to vector<8x32xf32>
    %113 = arith.subf %103, %112 : vector<8x32xf32>
    %114 = arith.mulf %113, %113 : vector<8x32xf32>
    %cst_63 = arith.constant dense<0.000000e+00> : vector<8xf32>
    %115 = vector.multi_reduction <add>, %114, %cst_63 [1] : vector<8x32xf32> to vector<8xf32>
    %116 = vector.shape_cast %115 : vector<8xf32> to vector<8x1xf32>
    %cst_64 = arith.constant 3.200000e+01 : f32
    %117 = vector.broadcast %cst_64 : f32 to vector<8x1xf32>
    %118 = arith.divf %116, %117 : vector<8x1xf32>
    %119 = vector.broadcast %111 : vector<8x1xf32> to vector<8x32xf32>
    %120 = arith.subf %103, %119 : vector<8x32xf32>
    %cst_65 = arith.constant 9.99999996E-13 : f32
    %121 = vector.broadcast %cst_65 : f32 to vector<8x1xf32>
    %122 = arith.addf %118, %121 : vector<8x1xf32>
    %123 = math.rsqrt %122 : vector<8x1xf32>
    %124 = vector.broadcast %123 : vector<8x1xf32> to vector<8x32xf32>
    %125 = arith.mulf %120, %124 : vector<8x32xf32>
    %126 = vector.broadcast %105 : vector<1x32xf32> to vector<8x32xf32>
    %127 = arith.mulf %125, %126 : vector<8x32xf32>
    %128 = vector.broadcast %107 : vector<1x32xf32> to vector<8x32xf32>
    %129 = arith.addf %127, %128 : vector<8x32xf32>
    %c0_66 = arith.constant 0 : index
    %c0_67 = arith.constant 0 : index
    %130 = vector.load %arg23[%c0_66, %c0_67] : memref<8x32xf32, #tpu.memory_space<vmem>>, vector<8x32xf32>
    tpu.vector_store %arg23[%c0_66, %c0_67], %129 {strides = array<i32>} : memref<8x32xf32, #tpu.memory_space<vmem>>, vector<8x32xf32>,
    %c1_i32 = arith.constant 1 : i32
    %131 = arith.cmpi eq, %arg1, %c1_i32 : i32
    %132 = arith.extui %131 : i1 to i32
    %c0_i32_68 = arith.constant 0 : i32
    %133 = arith.cmpi ne, %132, %c0_i32_68 : i32
    scf.if %133 {
      %134 = vector.extract_strided_slice %129 {offsets = [0, 0], sizes = [1, 32], strides = [1, 1]} : vector<8x32xf32> to vector<1x32xf32>
      %c0_69 = arith.constant 0 : index
      %c0_70 = arith.constant 0 : index
      %135 = vector.load %arg18[%c0_69, %c0_70] : memref<32x32xbf16, #tpu.memory_space<vmem>>, vector<32x32xbf16>
      %136 = arith.truncf %134 : vector<1x32xf32> to vector<1x32xbf16>
      %cst_71 = arith.constant dense<0.000000e+00> : vector<1x32xf32>
      %137 = tpu.matmul %136, %135, %cst_71 {dimension_numbers = #tpu.dot_dimension_numbers<[1], [0], [0], [1], [0, 0, 1, 1], [], []>} : vector<1x32xbf16>, vector<32x32xbf16>, vector<1x32xf32> -> vector<1x32xf32>
      %c0_72 = arith.constant 0 : index
      %c0_73 = arith.constant 0 : index
      %138 = vector.load %arg19[%c0_72, %c0_73] : memref<1x32xf32, #tpu.memory_space<vmem>>, vector<1x32xf32>
      %139 = arith.addf %137, %138 : vector<1x32xf32>
      %140 = math.tanh %139 : vector<1x32xf32>
      %c0_74 = arith.constant 0 : index
      %c0_75 = arith.constant 0 : index
      %141 = vector.load %arg20[%c0_74, %c0_75] : memref<32x128xbf16, #tpu.memory_space<vmem>>, vector<32x128xbf16>
      %142 = arith.truncf %140 : vector<1x32xf32> to vector<1x32xbf16>
      %cst_76 = arith.constant dense<0.000000e+00> : vector<1x128xf32>
      %143 = tpu.matmul %142, %141, %cst_76 {dimension_numbers = #tpu.dot_dimension_numbers<[1], [0], [0], [1], [0, 0, 1, 1], [], []>} : vector<1x32xbf16>, vector<32x128xbf16>, vector<1x128xf32> -> vector<1x128xf32>
      %c0_77 = arith.constant 0 : index
      %c0_78 = arith.constant 0 : index
      %144 = vector.load %arg21[%c0_77, %c0_78] : memref<1x128xf32, #tpu.memory_space<vmem>>, vector<1x128xf32>
      %145 = arith.addf %143, %144 : vector<1x128xf32>
      %c0_79 = arith.constant 0 : index
      %c0_80 = arith.constant 0 : index
      %c0_81 = arith.constant 0 : index
      %146 = vector.load %arg22[%c0_79, %c0_80, %c0_81] : memref<1x1x128xf32, #tpu.memory_space<vmem>>, vector<1x1x128xf32>
      %147 = vector.shape_cast %146 : vector<1x1x128xf32> to vector<1x128xf32>
      %148 = vector.shape_cast %145 : vector<1x128xf32> to vector<1x1x128xf32>
      tpu.vector_store %arg22[%c0_79, %c0_80, %c0_81], %148 {strides = array<i32>} : memref<1x1x128xf32, #tpu.memory_space<vmem>>, vector<1x1x128xf32>,
    } else {
    }
    return
  }
  func.func @transform_0(%arg0: i32, %arg1: i32) -> (i32, i32, i32) {
    %c0_i32 = arith.constant 0 : i32
    %c0_i32_0 = arith.constant 0 : i32
    %c0_i32_1 = arith.constant 0 : i32
    return %arg0, %c0_i32, %c0_i32_0 : i32, i32, i32
  }
  func.func @transform_1(%arg0: i32, %arg1: i32) -> (i32, i32, i32) {
    %c0_i32 = arith.constant 0 : i32
    %c0_i32_0 = arith.constant 0 : i32
    %c0_i32_1 = arith.constant 0 : i32
    return %arg0, %c0_i32, %c0_i32_0 : i32, i32, i32
  }
  func.func @transform_2(%arg0: i32, %arg1: i32) -> (i32, i32) {
    %c0_i32 = arith.constant 0 : i32
    %c0_i32_0 = arith.constant 0 : i32
    %c0_i32_1 = arith.constant 0 : i32
    return %c0_i32, %c0_i32_0 : i32, i32
  }
  func.func @transform_3(%arg0: i32, %arg1: i32) -> (i32, i32) {
    %c0_i32 = arith.constant 0 : i32
    %c0_i32_0 = arith.constant 0 : i32
    %c0_i32_1 = arith.constant 0 : i32
    return %c0_i32, %c0_i32_0 : i32, i32
  }
  func.func @transform_4(%arg0: i32, %arg1: i32) -> (i32, i32, i32, i32) {
    %c0_i32 = arith.constant 0 : i32
    %c0_i32_0 = arith.constant 0 : i32
    %c0_i32_1 = arith.constant 0 : i32
    %c0_i32_2 = arith.constant 0 : i32
    return %arg1, %c0_i32, %c0_i32_0, %c0_i32_1 : i32, i32, i32, i32
  }
  func.func @transform_5(%arg0: i32, %arg1: i32) -> (i32, i32, i32, i32) {
    %c0_i32 = arith.constant 0 : i32
    %c0_i32_0 = arith.constant 0 : i32
    %c0_i32_1 = arith.constant 0 : i32
    %c0_i32_2 = arith.constant 0 : i32
    return %arg1, %c0_i32, %c0_i32_0, %c0_i32_1 : i32, i32, i32, i32
  }
  func.func @transform_6(%arg0: i32, %arg1: i32) -> (i32, i32, i32, i32) {
    %c0_i32 = arith.constant 0 : i32
    %c0_i32_0 = arith.constant 0 : i32
    %c0_i32_1 = arith.constant 0 : i32
    %c0_i32_2 = arith.constant 0 : i32
    return %arg1, %c0_i32, %c0_i32_0, %c0_i32_1 : i32, i32, i32, i32
  }
  func.func @transform_7(%arg0: i32, %arg1: i32) -> (i32, i32, i32) {
    %c0_i32 = arith.constant 0 : i32
    %c0_i32_0 = arith.constant 0 : i32
    %c0_i32_1 = arith.constant 0 : i32
    return %arg1, %c0_i32, %c0_i32_0 : i32, i32, i32
  }
  func.func @transform_8(%arg0: i32, %arg1: i32) -> (i32, i32, i32) {
    %c0_i32 = arith.constant 0 : i32
    %c0_i32_0 = arith.constant 0 : i32
    %c0_i32_1 = arith.constant 0 : i32
    return %arg1, %c0_i32, %c0_i32_0 : i32, i32, i32
  }
  func.func @transform_9(%arg0: i32, %arg1: i32) -> (i32, i32, i32) {
    %c0_i32 = arith.constant 0 : i32
    %c0_i32_0 = arith.constant 0 : i32
    %c0_i32_1 = arith.constant 0 : i32
    return %arg1, %c0_i32, %c0_i32_0 : i32, i32, i32
  }
  func.func @transform_10(%arg0: i32, %arg1: i32) -> (i32, i32, i32) {
    %c0_i32 = arith.constant 0 : i32
    %c0_i32_0 = arith.constant 0 : i32
    %c0_i32_1 = arith.constant 0 : i32
    return %arg1, %c0_i32, %c0_i32_0 : i32, i32, i32
  }
  func.func @transform_11(%arg0: i32, %arg1: i32) -> (i32, i32, i32) {
    %c0_i32 = arith.constant 0 : i32
    %c0_i32_0 = arith.constant 0 : i32
    %c0_i32_1 = arith.constant 0 : i32
    return %arg1, %c0_i32, %c0_i32_0 : i32, i32, i32
  }
  func.func @transform_12(%arg0: i32, %arg1: i32) -> (i32, i32, i32) {
    %c0_i32 = arith.constant 0 : i32
    %c0_i32_0 = arith.constant 0 : i32
    %c0_i32_1 = arith.constant 0 : i32
    return %arg1, %c0_i32, %c0_i32_0 : i32, i32, i32
  }
  func.func @transform_13(%arg0: i32, %arg1: i32) -> (i32, i32, i32) {
    %c0_i32 = arith.constant 0 : i32
    %c0_i32_0 = arith.constant 0 : i32
    %c0_i32_1 = arith.constant 0 : i32
    return %arg1, %c0_i32, %c0_i32_0 : i32, i32, i32
  }
  func.func @transform_14(%arg0: i32, %arg1: i32) -> (i32, i32, i32) {
    %c0_i32 = arith.constant 0 : i32
    %c0_i32_0 = arith.constant 0 : i32
    %c0_i32_1 = arith.constant 0 : i32
    return %arg1, %c0_i32, %c0_i32_0 : i32, i32, i32
  }
  func.func @transform_15(%arg0: i32, %arg1: i32) -> (i32, i32, i32) {
    %c0_i32 = arith.constant 0 : i32
    %c0_i32_0 = arith.constant 0 : i32
    %c0_i32_1 = arith.constant 0 : i32
    return %arg1, %c0_i32, %c0_i32_0 : i32, i32, i32
  }
  func.func @transform_16(%arg0: i32, %arg1: i32) -> (i32, i32) {
    %c0_i32 = arith.constant 0 : i32
    %c0_i32_0 = arith.constant 0 : i32
    %c0_i32_1 = arith.constant 0 : i32
    return %c0_i32, %c0_i32_0 : i32, i32
  }
  func.func @transform_17(%arg0: i32, %arg1: i32) -> (i32, i32) {
    %c0_i32 = arith.constant 0 : i32
    %c0_i32_0 = arith.constant 0 : i32
    %c0_i32_1 = arith.constant 0 : i32
    return %c0_i32, %c0_i32_0 : i32, i32
  }
  func.func @transform_18(%arg0: i32, %arg1: i32) -> (i32, i32) {
    %c0_i32 = arith.constant 0 : i32
    %c0_i32_0 = arith.constant 0 : i32
    %c0_i32_1 = arith.constant 0 : i32
    return %c0_i32, %c0_i32_0 : i32, i32
  }
  func.func @transform_19(%arg0: i32, %arg1: i32) -> (i32, i32) {
    %c0_i32 = arith.constant 0 : i32
    %c0_i32_0 = arith.constant 0 : i32
    %c0_i32_1 = arith.constant 0 : i32
    return %c0_i32, %c0_i32_0 : i32, i32
  }
  func.func @transform_20(%arg0: i32, %arg1: i32) -> (i32, i32, i32) {
    %c0_i32 = arith.constant 0 : i32
    %c0_i32_0 = arith.constant 0 : i32
    %c0_i32_1 = arith.constant 0 : i32
    return %arg0, %c0_i32, %c0_i32_0 : i32, i32, i32
  }
}

</mosaic_0001>

<llo_original>
// kernel: bert_ml_clf2_forward.1
$region0: #{bert_ml_clf2_forward.1}
  #allocation0 [shape = 'u32[]', space=smem, size = 0x4, offset = 0x4, fixed_abs, tag = 'smem constant byte address 0x4 - core index']
  #allocation1 [shape = 'u32[144,128]{1,0:T(1,128)}', space=vmem, size = 0x12000, scoped, tag = 'internal scratch']
  #allocation2 [shape = 'f32[8,32]{1,0:T(8,128)}', space=vmem, size = 0x1000, scoped, tag = 'scratch operand']
  %s0 = inlined_call_operand.vmem [shape: f32[2,8,32], index: 0, kind: input, shape index: {}]
  %s1 = inlined_call_operand.vmem [shape: f32[2,1,8], index: 1, kind: input, shape index: {}]
  %s2 = inlined_call_operand.vmem [shape: f32[1,32], index: 2, kind: input, shape index: {}]
  %s3 = inlined_call_operand.vmem [shape: f32[1,32], index: 3, kind: input, shape index: {}]
  %s4 = inlined_call_operand.vmem [shape: bf16[2,6,32,16], index: 4, kind: input, shape index: {}]
  %s5 = inlined_call_operand.vmem [shape: f32[2,6,1,16], index: 5, kind: input, shape index: {}]
  %s6 = inlined_call_operand.vmem [shape: bf16[2,2,16,32], index: 6, kind: input, shape index: {}]
  %s7 = inlined_call_operand.vmem [shape: f32[2,1,32], index: 7, kind: input, shape index: {}]
  %s8 = inlined_call_operand.vmem [shape: bf16[2,32,64], index: 8, kind: input, shape index: {}]
  %s9 = inlined_call_operand.vmem [shape: f32[2,1,64], index: 9, kind: input, shape index: {}]
  %s10 = inlined_call_operand.vmem [shape: bf16[2,64,32], index: 10, kind: input, shape index: {}]
  %s11 = inlined_call_operand.vmem [shape: f32[2,1,32], index: 11, kind: input, shape index: {}]
  %s12 = inlined_call_operand.vmem [shape: f32[2,1,32], index: 12, kind: input, shape index: {}]
  %s13 = inlined_call_operand.vmem [shape: f32[2,1,32], index: 13, kind: input, shape index: {}]
  %s14 = inlined_call_operand.vmem [shape: f32[2,1,32], index: 14, kind: input, shape index: {}]
  %s15 = inlined_call_operand.vmem [shape: f32[2,1,32], index: 15, kind: input, shape index: {}]
  %s16 = inlined_call_operand.vmem [shape: bf16[32,32], index: 16, kind: input, shape index: {}]
  %s17 = inlined_call_operand.vmem [shape: f32[1,32], index: 17, kind: input, shape index: {}]
  %s18 = inlined_call_operand.vmem [shape: bf16[32,128], index: 18, kind: input, shape index: {}]
  %s19 = inlined_call_operand.vmem [shape: f32[1,128], index: 19, kind: input, shape index: {}]
  %s20 = inlined_call_operand.hbm [shape: f32[2,1,128], index: 20, kind: output, shape index: {}]
  %s21 = sld [smem:[#allocation0]]
  $region121: #{bert_ml_clf2_forward.1} parent=0
    _
  %s23 = ssub.s32 1, %s21
  %s24 = scalar_select 0, %s23, %s21
  $region1: #{bert_ml_clf2_forward.1} parent=0
    #allocation3 [shape = 'u8[1024]{0}', space=vmem, size = 0x400, scoped, tag = 'output window, operand 0']
    #allocation4 [shape = 's32[2]{0}', space=sflag, size = 0x8, scoped, tag = 'scoped memory for bert_ml_clf2_forward.1']
    %25 = vsyncpa [#allocation4], 0
    %s26 = scalar_lea.sflag [#allocation4], 1
    %27 = vsyncpa %s26, 0
    loop: start=0, step=1, limit=6
    $region2: #{bert_ml_clf2_forward.1} parent=1 // loop_pre_header
      _
    $region3: #{bert_ml_clf2_forward.1} parent=1 // loop_header
      %s29 = sphi 0, %s33
      %p30 = scmp.ge.s32.totalorder %s29, 6
      %s36 = sphi 0, %s48
      %s37 = sphi 0, %s44
      %s38 = sphi 0, %s36
      %s39 = sphi 0, %s37
      %s40 = sphi 0, %s38
      %s41 = sphi 0, %s39
      %s51 = sphi 0, %s53
      %s54 = sphi 0, %s51
      %s55 = sphi 0, %s54
      %s71 = sphi 0, %s55
      %s77 = sphi 0, %s79
      %s80 = sphi 0, %s77
      %s81 = sphi 0, %s80
      %s97 = sphi 0, %s81
      %s101 = sphi 0, %s101
      %s103 = sphi 0, %s101
      %s104 = sphi 0, %s103
      %s118 = sphi 0, %s104
      %s122 = sphi 0, %s122
      %s124 = sphi 0, %s122
      %s125 = sphi 0, %s124
      %s139 = sphi 0, %s125
      %s145 = sphi 0, %s147
      %s148 = sphi 0, %s145
      %s149 = sphi 0, %s148
      %s165 = sphi 0, %s149
      %s171 = sphi 0, %s173
      %s174 = sphi 0, %s171
      %s175 = sphi 0, %s174
      %s191 = sphi 0, %s175
      %s197 = sphi 0, %s199
      %s200 = sphi 0, %s197
      %s201 = sphi 0, %s200
      %s217 = sphi 0, %s201
      %s223 = sphi 0, %s225
      %s226 = sphi 0, %s223
      %s227 = sphi 0, %s226
      %s243 = sphi 0, %s227
      %s249 = sphi 0, %s251
      %s252 = sphi 0, %s249
      %s253 = sphi 0, %s252
      %s269 = sphi 0, %s253
      %s275 = sphi 0, %s277
      %s278 = sphi 0, %s275
      %s279 = sphi 0, %s278
      %s295 = sphi 0, %s279
      %s301 = sphi 0, %s303
      %s304 = sphi 0, %s301
      %s305 = sphi 0, %s304
      %s321 = sphi 0, %s305
      %s327 = sphi 0, %s329
      %s330 = sphi 0, %s327
      %s331 = sphi 0, %s330
      %s347 = sphi 0, %s331
      %s353 = sphi 0, %s355
      %s356 = sphi 0, %s353
      %s357 = sphi 0, %s356
      %s373 = sphi 0, %s357
      %s379 = sphi 0, %s381
      %s382 = sphi 0, %s379
      %s383 = sphi 0, %s382
      %s399 = sphi 0, %s383
      %s405 = sphi 0, %s407
      %s408 = sphi 0, %s405
      %s409 = sphi 0, %s408
      %s425 = sphi 0, %s409
      %s431 = sphi 0, %s433
      %s434 = sphi 0, %s431
      %s435 = sphi 0, %s434
      %s451 = sphi 0, %s435
      %s455 = sphi 0, %s455
      %s457 = sphi 0, %s455
      %s458 = sphi 0, %s457
      %s472 = sphi 0, %s458
      %s476 = sphi 0, %s476
      %s478 = sphi 0, %s476
      %s479 = sphi 0, %s478
      %s493 = sphi 0, %s479
      %s497 = sphi 0, %s497
      %s499 = sphi 0, %s497
      %s500 = sphi 0, %s499
      %s514 = sphi 0, %s500
      %s518 = sphi 0, %s518
      %s520 = sphi 0, %s518
      %s521 = sphi 0, %s520
      %s535 = sphi 0, %s521
      %s541 = sphi 0, %s543
      %s544 = sphi 0, %s541
      %s545 = sphi 0, %s544
      %s561 = sphi 0, %s545
    $region4: #{bert_ml_clf2_forward.1} parent=1 // loop_header_branch
      %32 = sbr.rel (%p30) target = $region8
    $region5: #{bert_ml_clf2_forward.1} parent=1 // loop_body
      %s34 = ssub.s32 %s29, 1
      %s35 = ssub.s32 %s29, 2
      %s42 = sadd.s32 1, %s37
      %p43 = scmp.ge.s32.totalorder %s42, 2
      %s44 = scalar_select %p43, 0, %s42
      %s45 = sadd.s32 1, %s36
      %s46 = scalar_select %p43, %s45, %s36
      %p47 = scmp.ge.s32.totalorder %s46, 2
      %s48 = scalar_select %p47, 0, %s46
      %s49 = ssub.s32 %s36, %s48
      %p50 = scmp.eq.s32.totalorder %s49, 0
      %s52 = sadd.s32 %s51, 1
      %s53 = scalar_select %p50, %s51, %s52
      %p56 = pneg %p50
      %p57 = scmp.eq.s32.totalorder %s29, 3
      %p58 = por %p56, %p57
      %p59 = scmp.ne.s32.totalorder %s51, %s54
      %p60 = scmp.eq.s32.totalorder %s29, 0
      %p61 = por %p59, %p60
      %p62 = scmp.ne.s32.totalorder %s51, %s54
      %p63 = scmp.eq.s32.totalorder %s34, 3
      %p64 = por %p62, %p63
      %p65 = scmp.ne.s32.totalorder %s54, %s55
      %p66 = scmp.eq.s32.totalorder %s34, 0
      %p67 = por %p65, %p66
      %p68 = scmp.ne.s32.totalorder %s54, %s55
      %p69 = scmp.eq.s32.totalorder %s35, 3
      %p70 = por %p68, %p69
      %p72 = scmp.ne.s32.totalorder %s55, %s71
      %p73 = scmp.eq.s32.totalorder %s35, 0
      %p74 = por %p72, %p73
      %s75 = ssub.s32 %s36, %s48
      %p76 = scmp.eq.s32.totalorder %s75, 0
      %s78 = sadd.s32 %s77, 1
      %s79 = scalar_select %p76, %s77, %s78
      %p82 = pneg %p76
      %p83 = scmp.eq.s32.totalorder %s29, 3
      %p84 = por %p82, %p83
      %p85 = scmp.ne.s32.totalorder %s77, %s80
      %p86 = scmp.eq.s32.totalorder %s29, 0
      %p87 = por %p85, %p86
      %p88 = scmp.ne.s32.totalorder %s77, %s80
      %p89 = scmp.eq.s32.totalorder %s34, 3
      %p90 = por %p88, %p89
      %p91 = scmp.ne.s32.totalorder %s80, %s81
      %p92 = scmp.eq.s32.totalorder %s34, 0
      %p93 = por %p91, %p92
      %p94 = scmp.ne.s32.totalorder %s80, %s81
      %p95 = scmp.eq.s32.totalorder %s35, 3
      %p96 = por %p94, %p95
      %p98 = scmp.ne.s32.totalorder %s81, %s97
      %p99 = scmp.eq.s32.totalorder %s35, 0
      %p100 = por %p98, %p99
      %s102 = sadd.s32 %s101, 1
      %p105 = scmp.eq.s32.totalorder %s29, 3
      %p106 = scmp.ne.s32.totalorder %s101, %s103
      %p107 = scmp.eq.s32.totalorder %s29, 0
      %p108 = por %p106, %p107
      %p109 = scmp.ne.s32.totalorder %s101, %s103
      %p110 = scmp.eq.s32.totalorder %s34, 3
      %p111 = por %p109, %p110
      %p112 = scmp.ne.s32.totalorder %s103, %s104
      %p113 = scmp.eq.s32.totalorder %s34, 0
      %p114 = por %p112, %p113
      %p115 = scmp.ne.s32.totalorder %s103, %s104
      %p116 = scmp.eq.s32.totalorder %s35, 3
      %p117 = por %p115, %p116
      %p119 = scmp.ne.s32.totalorder %s104, %s118
      %p120 = scmp.eq.s32.totalorder %s35, 0
      %p121 = por %p119, %p120
      %s123 = sadd.s32 %s122, 1
      %p126 = scmp.eq.s32.totalorder %s29, 3
      %p127 = scmp.ne.s32.totalorder %s122, %s124
      %p128 = scmp.eq.s32.totalorder %s29, 0
      %p129 = por %p127, %p128
      %p130 = scmp.ne.s32.totalorder %s122, %s124
      %p131 = scmp.eq.s32.totalorder %s34, 3
      %p132 = por %p130, %p131
      %p133 = scmp.ne.s32.totalorder %s124, %s125
      %p134 = scmp.eq.s32.totalorder %s34, 0
      %p135 = por %p133, %p134
      %p136 = scmp.ne.s32.totalorder %s124, %s125
      %p137 = scmp.eq.s32.totalorder %s35, 3
      %p138 = por %p136, %p137
      %p140 = scmp.ne.s32.totalorder %s125, %s139
      %p141 = scmp.eq.s32.totalorder %s35, 0
      %p142 = por %p140, %p141
      %s143 = ssub.s32 %s37, %s44
      %p144 = scmp.eq.s32.totalorder %s143, 0
      %s146 = sadd.s32 %s145, 1
      %s147 = scalar_select %p144, %s145, %s146
      %p150 = pneg %p144
      %p151 = scmp.eq.s32.totalorder %s29, 3
      %p152 = por %p150, %p151
      %p153 = scmp.ne.s32.totalorder %s145, %s148
      %p154 = scmp.eq.s32.totalorder %s29, 0
      %p155 = por %p153, %p154
      %p156 = scmp.ne.s32.totalorder %s145, %s148
      %p157 = scmp.eq.s32.totalorder %s34, 3
      %p158 = por %p156, %p157
      %p159 = scmp.ne.s32.totalorder %s148, %s149
      %p160 = scmp.eq.s32.totalorder %s34, 0
      %p161 = por %p159, %p160
      %p162 = scmp.ne.s32.totalorder %s148, %s149
      %p163 = scmp.eq.s32.totalorder %s35, 3
      %p164 = por %p162, %p163
      %p166 = scmp.ne.s32.totalorder %s149, %s165
      %p167 = scmp.eq.s32.totalorder %s35, 0
      %p168 = por %p166, %p167
      %s169 = ssub.s32 %s37, %s44
      %p170 = scmp.eq.s32.totalorder %s169, 0
      %s172 = sadd.s32 %s171, 1
      %s173 = scalar_select %p170, %s171, %s172
      %p176 = pneg %p170
      %p177 = scmp.eq.s32.totalorder %s29, 3
      %p178 = por %p176, %p177
      %p179 = scmp.ne.s32.totalorder %s171, %s174
      %p180 = scmp.eq.s32.totalorder %s29, 0
      %p181 = por %p179, %p180
      %p182 = scmp.ne.s32.totalorder %s171, %s174
      %p183 = scmp.eq.s32.totalorder %s34, 3
      %p184 = por %p182, %p183
      %p185 = scmp.ne.s32.totalorder %s174, %s175
      %p186 = scmp.eq.s32.totalorder %s34, 0
      %p187 = por %p185, %p186
      %p188 = scmp.ne.s32.totalorder %s174, %s175
      %p189 = scmp.eq.s32.totalorder %s35, 3
      %p190 = por %p188, %p189
      %p192 = scmp.ne.s32.totalorder %s175, %s191
      %p193 = scmp.eq.s32.totalorder %s35, 0
      %p194 = por %p192, %p193
      %s195 = ssub.s32 %s37, %s44
      %p196 = scmp.eq.s32.totalorder %s195, 0
      %s198 = sadd.s32 %s197, 1
      %s199 = scalar_select %p196, %s197, %s198
      %p202 = pneg %p196
      %p203 = scmp.eq.s32.totalorder %s29, 3
      %p204 = por %p202, %p203
      %p205 = scmp.ne.s32.totalorder %s197, %s200
      %p206 = scmp.eq.s32.totalorder %s29, 0
      %p207 = por %p205, %p206
      %p208 = scmp.ne.s32.totalorder %s197, %s200
      %p209 = scmp.eq.s32.totalorder %s34, 3
      %p210 = por %p208, %p209
      %p211 = scmp.ne.s32.totalorder %s200, %s201
      %p212 = scmp.eq.s32.totalorder %s34, 0
      %p213 = por %p211, %p212
      %p214 = scmp.ne.s32.totalorder %s200, %s201
      %p215 = scmp.eq.s32.totalorder %s35, 3
      %p216 = por %p214, %p215
      %p218 = scmp.ne.s32.totalorder %s201, %s217
      %p219 = scmp.eq.s32.totalorder %s35, 0
      %p220 = por %p218, %p219
      %s221 = ssub.s32 %s37, %s44
      %p222 = scmp.eq.s32.totalorder %s221, 0
      %s224 = sadd.s32 %s223, 1
      %s225 = scalar_select %p222, %s223, %s224
      %p228 = pneg %p222
      %p229 = scmp.eq.s32.totalorder %s29, 3
      %p230 = por %p228, %p229
      %p231 = scmp.ne.s32.totalorder %s223, %s226
      %p232 = scmp.eq.s32.totalorder %s29, 0
      %p233 = por %p231, %p232
      %p234 = scmp.ne.s32.totalorder %s223, %s226
      %p235 = scmp.eq.s32.totalorder %s34, 3
      %p236 = por %p234, %p235
      %p237 = scmp.ne.s32.totalorder %s226, %s227
      %p238 = scmp.eq.s32.totalorder %s34, 0
      %p239 = por %p237, %p238
      %p240 = scmp.ne.s32.totalorder %s226, %s227
      %p241 = scmp.eq.s32.totalorder %s35, 3
      %p242 = por %p240, %p241
      %p244 = scmp.ne.s32.totalorder %s227, %s243
      %p245 = scmp.eq.s32.totalorder %s35, 0
      %p246 = por %p244, %p245
      %s247 = ssub.s32 %s37, %s44
      %p248 = scmp.eq.s32.totalorder %s247, 0
      %s250 = sadd.s32 %s249, 1
      %s251 = scalar_select %p248, %s249, %s250
      %p254 = pneg %p248
      %p255 = scmp.eq.s32.totalorder %s29, 3
      %p256 = por %p254, %p255
      %p257 = scmp.ne.s32.totalorder %s249, %s252
      %p258 = scmp.eq.s32.totalorder %s29, 0
      %p259 = por %p257, %p258
      %p260 = scmp.ne.s32.totalorder %s249, %s252
      %p261 = scmp.eq.s32.totalorder %s34, 3
      %p262 = por %p260, %p261
      %p263 = scmp.ne.s32.totalorder %s252, %s253
      %p264 = scmp.eq.s32.totalorder %s34, 0
      %p265 = por %p263, %p264
      %p266 = scmp.ne.s32.totalorder %s252, %s253
      %p267 = scmp.eq.s32.totalorder %s35, 3
      %p268 = por %p266, %p267
      %p270 = scmp.ne.s32.totalorder %s253, %s269
      %p271 = scmp.eq.s32.totalorder %s35, 0
      %p272 = por %p270, %p271
      %s273 = ssub.s32 %s37, %s44
      %p274 = scmp.eq.s32.totalorder %s273, 0
      %s276 = sadd.s32 %s275, 1
      %s277 = scalar_select %p274, %s275, %s276
      %p280 = pneg %p274
      %p281 = scmp.eq.s32.totalorder %s29, 3
      %p282 = por %p280, %p281
      %p283 = scmp.ne.s32.totalorder %s275, %s278
      %p284 = scmp.eq.s32.totalorder %s29, 0
      %p285 = por %p283, %p284
      %p286 = scmp.ne.s32.totalorder %s275, %s278
      %p287 = scmp.eq.s32.totalorder %s34, 3
      %p288 = por %p286, %p287
      %p289 = scmp.ne.s32.totalorder %s278, %s279
      %p290 = scmp.eq.s32.totalorder %s34, 0
      %p291 = por %p289, %p290
      %p292 = scmp.ne.s32.totalorder %s278, %s279
      %p293 = scmp.eq.s32.totalorder %s35, 3
      %p294 = por %p292, %p293
      %p296 = scmp.ne.s32.totalorder %s279, %s295
      %p297 = scmp.eq.s32.totalorder %s35, 0
      %p298 = por %p296, %p297
      %s299 = ssub.s32 %s37, %s44
      %p300 = scmp.eq.s32.totalorder %s299, 0
      %s302 = sadd.s32 %s301, 1
      %s303 = scalar_select %p300, %s301, %s302
      %p306 = pneg %p300
      %p307 = scmp.eq.s32.totalorder %s29, 3
      %p308 = por %p306, %p307
      %p309 = scmp.ne.s32.totalorder %s301, %s304
      %p310 = scmp.eq.s32.totalorder %s29, 0
      %p311 = por %p309, %p310
      %p312 = scmp.ne.s32.totalorder %s301, %s304
      %p313 = scmp.eq.s32.totalorder %s34, 3
      %p314 = por %p312, %p313
      %p315 = scmp.ne.s32.totalorder %s304, %s305
      %p316 = scmp.eq.s32.totalorder %s34, 0
      %p317 = por %p315, %p316
      %p318 = scmp.ne.s32.totalorder %s304, %s305
      %p319 = scmp.eq.s32.totalorder %s35, 3
      %p320 = por %p318, %p319
      %p322 = scmp.ne.s32.totalorder %s305, %s321
      %p323 = scmp.eq.s32.totalorder %s35, 0
      %p324 = por %p322, %p323
      %s325 = ssub.s32 %s37, %s44
      %p326 = scmp.eq.s32.totalorder %s325, 0
      %s328 = sadd.s32 %s327, 1
      %s329 = scalar_select %p326, %s327, %s328
      %p332 = pneg %p326
      %p333 = scmp.eq.s32.totalorder %s29, 3
      %p334 = por %p332, %p333
      %p335 = scmp.ne.s32.totalorder %s327, %s330
      %p336 = scmp.eq.s32.totalorder %s29, 0
      %p337 = por %p335, %p336
      %p338 = scmp.ne.s32.totalorder %s327, %s330
      %p339 = scmp.eq.s32.totalorder %s34, 3
      %p340 = por %p338, %p339
      %p341 = scmp.ne.s32.totalorder %s330, %s331
      %p342 = scmp.eq.s32.totalorder %s34, 0
      %p343 = por %p341, %p342
      %p344 = scmp.ne.s32.totalorder %s330, %s331
      %p345 = scmp.eq.s32.totalorder %s35, 3
      %p346 = por %p344, %p345
      %p348 = scmp.ne.s32.totalorder %s331, %s347
      %p349 = scmp.eq.s32.totalorder %s35, 0
      %p350 = por %p348, %p349
      %s351 = ssub.s32 %s37, %s44
      %p352 = scmp.eq.s32.totalorder %s351, 0
      %s354 = sadd.s32 %s353, 1
      %s355 = scalar_select %p352, %s353, %s354
      %p358 = pneg %p352
      %p359 = scmp.eq.s32.totalorder %s29, 3
      %p360 = por %p358, %p359
      %p361 = scmp.ne.s32.totalorder %s353, %s356
      %p362 = scmp.eq.s32.totalorder %s29, 0
      %p363 = por %p361, %p362
      %p364 = scmp.ne.s32.totalorder %s353, %s356
      %p365 = scmp.eq.s32.totalorder %s34, 3
      %p366 = por %p364, %p365
      %p367 = scmp.ne.s32.totalorder %s356, %s357
      %p368 = scmp.eq.s32.totalorder %s34, 0
      %p369 = por %p367, %p368
      %p370 = scmp.ne.s32.totalorder %s356, %s357
      %p371 = scmp.eq.s32.totalorder %s35, 3
      %p372 = por %p370, %p371
      %p374 = scmp.ne.s32.totalorder %s357, %s373
      %p375 = scmp.eq.s32.totalorder %s35, 0
      %p376 = por %p374, %p375
      %s377 = ssub.s32 %s37, %s44
      %p378 = scmp.eq.s32.totalorder %s377, 0
      %s380 = sadd.s32 %s379, 1
      %s381 = scalar_select %p378, %s379, %s380
      %p384 = pneg %p378
      %p385 = scmp.eq.s32.totalorder %s29, 3
      %p386 = por %p384, %p385
      %p387 = scmp.ne.s32.totalorder %s379, %s382
      %p388 = scmp.eq.s32.totalorder %s29, 0
      %p389 = por %p387, %p388
      %p390 = scmp.ne.s32.totalorder %s379, %s382
      %p391 = scmp.eq.s32.totalorder %s34, 3
      %p392 = por %p390, %p391
      %p393 = scmp.ne.s32.totalorder %s382, %s383
      %p394 = scmp.eq.s32.totalorder %s34, 0
      %p395 = por %p393, %p394
      %p396 = scmp.ne.s32.totalorder %s382, %s383
      %p397 = scmp.eq.s32.totalorder %s35, 3
      %p398 = por %p396, %p397
      %p400 = scmp.ne.s32.totalorder %s383, %s399
      %p401 = scmp.eq.s32.totalorder %s35, 0
      %p402 = por %p400, %p401
      %s403 = ssub.s32 %s37, %s44
      %p404 = scmp.eq.s32.totalorder %s403, 0
      %s406 = sadd.s32 %s405, 1
      %s407 = scalar_select %p404, %s405, %s406
      %p410 = pneg %p404
      %p411 = scmp.eq.s32.totalorder %s29, 3
      %p412 = por %p410, %p411
      %p413 = scmp.ne.s32.totalorder %s405, %s408
      %p414 = scmp.eq.s32.totalorder %s29, 0
      %p415 = por %p413, %p414
      %p416 = scmp.ne.s32.totalorder %s405, %s408
      %p417 = scmp.eq.s32.totalorder %s34, 3
      %p418 = por %p416, %p417
      %p419 = scmp.ne.s32.totalorder %s408, %s409
      %p420 = scmp.eq.s32.totalorder %s34, 0
      %p421 = por %p419, %p420
      %p422 = scmp.ne.s32.totalorder %s408, %s409
      %p423 = scmp.eq.s32.totalorder %s35, 3
      %p424 = por %p422, %p423
      %p426 = scmp.ne.s32.totalorder %s409, %s425
      %p427 = scmp.eq.s32.totalorder %s35, 0
      %p428 = por %p426, %p427
      %s429 = ssub.s32 %s37, %s44
      %p430 = scmp.eq.s32.totalorder %s429, 0
      %s432 = sadd.s32 %s431, 1
      %s433 = scalar_select %p430, %s431, %s432
      %p436 = pneg %p430
      %p437 = scmp.eq.s32.totalorder %s29, 3
      %p438 = por %p436, %p437
      %p439 = scmp.ne.s32.totalorder %s431, %s434
      %p440 = scmp.eq.s32.totalorder %s29, 0
      %p441 = por %p439, %p440
      %p442 = scmp.ne.s32.totalorder %s431, %s434
      %p443 = scmp.eq.s32.totalorder %s34, 3
      %p444 = por %p442, %p443
      %p445 = scmp.ne.s32.totalorder %s434, %s435
      %p446 = scmp.eq.s32.totalorder %s34, 0
      %p447 = por %p445, %p446
      %p448 = scmp.ne.s32.totalorder %s434, %s435
      %p449 = scmp.eq.s32.totalorder %s35, 3
      %p450 = por %p448, %p449
      %p452 = scmp.ne.s32.totalorder %s435, %s451
      %p453 = scmp.eq.s32.totalorder %s35, 0
      %p454 = por %p452, %p453
      %s456 = sadd.s32 %s455, 1
      %p459 = scmp.eq.s32.totalorder %s29, 3
      %p460 = scmp.ne.s32.totalorder %s455, %s457
      %p461 = scmp.eq.s32.totalorder %s29, 0
      %p462 = por %p460, %p461
      %p463 = scmp.ne.s32.totalorder %s455, %s457
      %p464 = scmp.eq.s32.totalorder %s34, 3
      %p465 = por %p463, %p464
      %p466 = scmp.ne.s32.totalorder %s457, %s458
      %p467 = scmp.eq.s32.totalorder %s34, 0
      %p468 = por %p466, %p467
      %p469 = scmp.ne.s32.totalorder %s457, %s458
      %p470 = scmp.eq.s32.totalorder %s35, 3
      %p471 = por %p469, %p470
      %p473 = scmp.ne.s32.totalorder %s458, %s472
      %p474 = scmp.eq.s32.totalorder %s35, 0
      %p475 = por %p473, %p474
      %s477 = sadd.s32 %s476, 1
      %p480 = scmp.eq.s32.totalorder %s29, 3
      %p481 = scmp.ne.s32.totalorder %s476, %s478
      %p482 = scmp.eq.s32.totalorder %s29, 0
      %p483 = por %p481, %p482
      %p484 = scmp.ne.s32.totalorder %s476, %s478
      %p485 = scmp.eq.s32.totalorder %s34, 3
      %p486 = por %p484, %p485
      %p487 = scmp.ne.s32.totalorder %s478, %s479
      %p488 = scmp.eq.s32.totalorder %s34, 0
      %p489 = por %p487, %p488
      %p490 = scmp.ne.s32.totalorder %s478, %s479
      %p491 = scmp.eq.s32.totalorder %s35, 3
      %p492 = por %p490, %p491
      %p494 = scmp.ne.s32.totalorder %s479, %s493
      %p495 = scmp.eq.s32.totalorder %s35, 0
      %p496 = por %p494, %p495
      %s498 = sadd.s32 %s497, 1
      %p501 = scmp.eq.s32.totalorder %s29, 3
      %p502 = scmp.ne.s32.totalorder %s497, %s499
      %p503 = scmp.eq.s32.totalorder %s29, 0
      %p504 = por %p502, %p503
      %p505 = scmp.ne.s32.totalorder %s497, %s499
      %p506 = scmp.eq.s32.totalorder %s34, 3
      %p507 = por %p505, %p506
      %p508 = scmp.ne.s32.totalorder %s499, %s500
      %p509 = scmp.eq.s32.totalorder %s34, 0
      %p510 = por %p508, %p509
      %p511 = scmp.ne.s32.totalorder %s499, %s500
      %p512 = scmp.eq.s32.totalorder %s35, 3
      %p513 = por %p511, %p512
      %p515 = scmp.ne.s32.totalorder %s500, %s514
      %p516 = scmp.eq.s32.totalorder %s35, 0
      %p517 = por %p515, %p516
      %s519 = sadd.s32 %s518, 1
      %p522 = scmp.eq.s32.totalorder %s29, 3
      %p523 = scmp.ne.s32.totalorder %s518, %s520
      %p524 = scmp.eq.s32.totalorder %s29, 0
      %p525 = por %p523, %p524
      %p526 = scmp.ne.s32.totalorder %s518, %s520
      %p527 = scmp.eq.s32.totalorder %s34, 3
      %p528 = por %p526, %p527
      %p529 = scmp.ne.s32.totalorder %s520, %s521
      %p530 = scmp.eq.s32.totalorder %s34, 0
      %p531 = por %p529, %p530
      %p532 = scmp.ne.s32.totalorder %s520, %s521
      %p533 = scmp.eq.s32.totalorder %s35, 3
      %p534 = por %p532, %p533
      %p536 = scmp.ne.s32.totalorder %s521, %s535
      %p537 = scmp.eq.s32.totalorder %s35, 0
      %p538 = por %p536, %p537
      %s539 = ssub.s32 %s36, %s48
      %p540 = scmp.eq.s32.totalorder %s539, 0
      %s542 = sadd.s32 %s541, 1
      %s543 = scalar_select %p540, %s541, %s542
      %p546 = pneg %p540
      %p547 = scmp.eq.s32.totalorder %s29, 3
      %p548 = por %p546, %p547
      %p549 = scmp.ne.s32.totalorder %s541, %s544
      %p550 = scmp.eq.s32.totalorder %s29, 0
      %p551 = por %p549, %p550
      %p552 = scmp.ne.s32.totalorder %s541, %s544
      %p553 = scmp.eq.s32.totalorder %s34, 3
      %p554 = por %p552, %p553
      %p555 = scmp.ne.s32.totalorder %s544, %s545
      %p556 = scmp.eq.s32.totalorder %s34, 0
      %p557 = por %p555, %p556
      %p558 = scmp.ne.s32.totalorder %s544, %s545
      %p559 = scmp.eq.s32.totalorder %s35, 3
      %p560 = por %p558, %p559
      %p562 = scmp.ne.s32.totalorder %s545, %s561
      %p563 = scmp.eq.s32.totalorder %s35, 0
      %p564 = por %p562, %p563
      %p565 = scmp.le.s32.totalorder 1, %s29
      %p566 = scmp.lt.s32.totalorder %s29, 5
      %p567 = pnand %p565, %p566
      %p568 = pneg %p567
      // Predicated region
      $region9: #{bert_ml_clf2_forward.1} parent=5 // pred_check
        _
      $region10: #{bert_ml_clf2_forward.1} parent=5 // pred_check_branch
        %570 = sbr.rel (%p567) target = $region12
      $region11: #{bert_ml_clf2_forward.1} parent=5 // pred_region
        %s571 = ssub.s32 %s29, 1
        // Predicated region
        $region13: #{bert_ml_clf2_forward.1} parent=11 // pred_check
          %p572 = pneg %p114
        $region14: #{bert_ml_clf2_forward.1} parent=11 // pred_check_branch
          %574 = sbr.rel (%p572) target = $region16
        $region15: #{bert_ml_clf2_forward.1} parent=11 // pred_region
          _
        $region16: #{bert_ml_clf2_forward.1} parent=11 // pred_fallthru
          _
        // Predicated region
        $region17: #{bert_ml_clf2_forward.1} parent=11 // pred_check
          %p575 = pneg %p135
        $region18: #{bert_ml_clf2_forward.1} parent=11 // pred_check_branch
          %577 = sbr.rel (%p575) target = $region20
        $region19: #{bert_ml_clf2_forward.1} parent=11 // pred_region
          _
        $region20: #{bert_ml_clf2_forward.1} parent=11 // pred_fallthru
          _
        // Predicated region
        $region21: #{bert_ml_clf2_forward.1} parent=11 // pred_check
          %p578 = pneg %p468
        $region22: #{bert_ml_clf2_forward.1} parent=11 // pred_check_branch
          %580 = sbr.rel (%p578) target = $region24
        $region23: #{bert_ml_clf2_forward.1} parent=11 // pred_region
          _
        $region24: #{bert_ml_clf2_forward.1} parent=11 // pred_fallthru
          _
        // Predicated region
        $region25: #{bert_ml_clf2_forward.1} parent=11 // pred_check
          %p581 = pneg %p489
        $region26: #{bert_ml_clf2_forward.1} parent=11 // pred_check_branch
          %583 = sbr.rel (%p581) target = $region28
        $region27: #{bert_ml_clf2_forward.1} parent=11 // pred_region
          _
        $region28: #{bert_ml_clf2_forward.1} parent=11 // pred_fallthru
          _
        // Predicated region
        $region29: #{bert_ml_clf2_forward.1} parent=11 // pred_check
          %p584 = pneg %p510
        $region30: #{bert_ml_clf2_forward.1} parent=11 // pred_check_branch
          %586 = sbr.rel (%p584) target = $region32
        $region31: #{bert_ml_clf2_forward.1} parent=11 // pred_region
          _
        $region32: #{bert_ml_clf2_forward.1} parent=11 // pred_fallthru
          _
        // Predicated region
        $region33: #{bert_ml_clf2_forward.1} parent=11 // pred_check
          %p587 = pneg %p531
        $region34: #{bert_ml_clf2_forward.1} parent=11 // pred_check_branch
          %589 = sbr.rel (%p587) target = $region36
        $region35: #{bert_ml_clf2_forward.1} parent=11 // pred_region
          _
        $region36: #{bert_ml_clf2_forward.1} parent=11 // pred_fallthru
          _
      $region12: #{bert_ml_clf2_forward.1} parent=5 // pred_fallthru
        _
      %p590 = scmp.lt.s32.totalorder %s29, 4
      // Predicated region
      $region37: #{bert_ml_clf2_forward.1} parent=5 // pred_check
        %p591 = pneg %p590
      $region38: #{bert_ml_clf2_forward.1} parent=5 // pred_check_branch
        %593 = sbr.rel (%p591) target = $region40
      $region39: #{bert_ml_clf2_forward.1} parent=5 // pred_region
        // Predicated region
        $region41: #{bert_ml_clf2_forward.1} parent=39 // pred_check
          %p594 = pneg %p61
        $region42: #{bert_ml_clf2_forward.1} parent=39 // pred_check_branch
          %596 = sbr.rel (%p594) target = $region44
        $region43: #{bert_ml_clf2_forward.1} parent=39 // pred_region
          %p597 = scmp.lt.s32.totalorder %s36, 1
          %s598 = scalar_select %p597, %s36, 1
          %s599 = smul.addr %s598, 8
          %s600 = scalar_lea.vmem %s0, %s599
        $region44: #{bert_ml_clf2_forward.1} parent=39 // pred_fallthru
          _
        // Predicated region
        $region45: #{bert_ml_clf2_forward.1} parent=39 // pred_check
          %p601 = pneg %p87
        $region46: #{bert_ml_clf2_forward.1} parent=39 // pred_check_branch
          %603 = sbr.rel (%p601) target = $region48
        $region47: #{bert_ml_clf2_forward.1} parent=39 // pred_region
          %p604 = scmp.lt.s32.totalorder %s36, 1
          %s605 = scalar_select %p604, %s36, 1
          %s606 = scalar_lea.vmem %s1, %s605
        $region48: #{bert_ml_clf2_forward.1} parent=39 // pred_fallthru
          _
        // Predicated region
        $region49: #{bert_ml_clf2_forward.1} parent=39 // pred_check
          %p607 = pneg %p155
        $region50: #{bert_ml_clf2_forward.1} parent=39 // pred_check_branch
          %609 = sbr.rel (%p607) target = $region52
        $region51: #{bert_ml_clf2_forward.1} parent=39 // pred_region
          %p610 = scmp.lt.s32.totalorder %s37, 1
          %s611 = scalar_select %p610, %s37, 1
          %s612 = smul.addr %s611, 24
          %s613 = smul.addr %s612, 4
          %s614 = scalar_lea.vmem %s4, %s613
        $region52: #{bert_ml_clf2_forward.1} parent=39 // pred_fallthru
          _
        // Predicated region
        $region53: #{bert_ml_clf2_forward.1} parent=39 // pred_check
          %p615 = pneg %p181
        $region54: #{bert_ml_clf2_forward.1} parent=39 // pred_check_branch
          %617 = sbr.rel (%p615) target = $region56
        $region55: #{bert_ml_clf2_forward.1} parent=39 // pred_region
          %p618 = scmp.lt.s32.totalorder %s37, 1
          %s619 = scalar_select %p618, %s37, 1
          %s620 = smul.addr %s619, 6
          %s621 = scalar_lea.vmem %s5, %s620
        $region56: #{bert_ml_clf2_forward.1} parent=39 // pred_fallthru
          _
        // Predicated region
        $region57: #{bert_ml_clf2_forward.1} parent=39 // pred_check
          %p622 = pneg %p207
        $region58: #{bert_ml_clf2_forward.1} parent=39 // pred_check_branch
          %624 = sbr.rel (%p622) target = $region60
        $region59: #{bert_ml_clf2_forward.1} parent=39 // pred_region
          %p625 = scmp.lt.s32.totalorder %s37, 1
          %s626 = scalar_select %p625, %s37, 1
          %s627 = smul.addr %s626, 4
          %s628 = smul.addr %s627, 4
          %s629 = scalar_lea.vmem %s6, %s628
        $region60: #{bert_ml_clf2_forward.1} parent=39 // pred_fallthru
          _
        // Predicated region
        $region61: #{bert_ml_clf2_forward.1} parent=39 // pred_check
          %p630 = pneg %p233
        $region62: #{bert_ml_clf2_forward.1} parent=39 // pred_check_branch
          %632 = sbr.rel (%p630) target = $region64
        $region63: #{bert_ml_clf2_forward.1} parent=39 // pred_region
          %p633 = scmp.lt.s32.totalorder %s37, 1
          %s634 = scalar_select %p633, %s37, 1
          %s635 = scalar_lea.vmem %s7, %s634
        $region64: #{bert_ml_clf2_forward.1} parent=39 // pred_fallthru
          _
        // Predicated region
        $region65: #{bert_ml_clf2_forward.1} parent=39 // pred_check
          %p636 = pneg %p259
        $region66: #{bert_ml_clf2_forward.1} parent=39 // pred_check_branch
          %638 = sbr.rel (%p636) target = $region68
        $region67: #{bert_ml_clf2_forward.1} parent=39 // pred_region
          %p639 = scmp.lt.s32.totalorder %s37, 1
          %s640 = scalar_select %p639, %s37, 1
          %s641 = smul.addr %s640, 4
          %s642 = smul.addr %s641, 4
          %s643 = scalar_lea.vmem %s8, %s642
        $region68: #{bert_ml_clf2_forward.1} parent=39 // pred_fallthru
          _
        // Predicated region
        $region69: #{bert_ml_clf2_forward.1} parent=39 // pred_check
          %p644 = pneg %p285
        $region70: #{bert_ml_clf2_forward.1} parent=39 // pred_check_branch
          %646 = sbr.rel (%p644) target = $region72
        $region71: #{bert_ml_clf2_forward.1} parent=39 // pred_region
          %p647 = scmp.lt.s32.totalorder %s37, 1
          %s648 = scalar_select %p647, %s37, 1
          %s649 = scalar_lea.vmem %s9, %s648
        $region72: #{bert_ml_clf2_forward.1} parent=39 // pred_fallthru
          _
        // Predicated region
        $region73: #{bert_ml_clf2_forward.1} parent=39 // pred_check
          %p650 = pneg %p311
        $region74: #{bert_ml_clf2_forward.1} parent=39 // pred_check_branch
          %652 = sbr.rel (%p650) target = $region76
        $region75: #{bert_ml_clf2_forward.1} parent=39 // pred_region
          %p653 = scmp.lt.s32.totalorder %s37, 1
          %s654 = scalar_select %p653, %s37, 1
          %s655 = smul.addr %s654, 8
          %s656 = smul.addr %s655, 4
          %s657 = scalar_lea.vmem %s10, %s656
        $region76: #{bert_ml_clf2_forward.1} parent=39 // pred_fallthru
          _
        // Predicated region
        $region77: #{bert_ml_clf2_forward.1} parent=39 // pred_check
          %p658 = pneg %p337
        $region78: #{bert_ml_clf2_forward.1} parent=39 // pred_check_branch
          %660 = sbr.rel (%p658) target = $region80
        $region79: #{bert_ml_clf2_forward.1} parent=39 // pred_region
          %p661 = scmp.lt.s32.totalorder %s37, 1
          %s662 = scalar_select %p661, %s37, 1
          %s663 = scalar_lea.vmem %s11, %s662
        $region80: #{bert_ml_clf2_forward.1} parent=39 // pred_fallthru
          _
        // Predicated region
        $region81: #{bert_ml_clf2_forward.1} parent=39 // pred_check
          %p664 = pneg %p363
        $region82: #{bert_ml_clf2_forward.1} parent=39 // pred_check_branch
          %666 = sbr.rel (%p664) target = $region84
        $region83: #{bert_ml_clf2_forward.1} parent=39 // pred_region
          %p667 = scmp.lt.s32.totalorder %s37, 1
          %s668 = scalar_select %p667, %s37, 1
          %s669 = scalar_lea.vmem %s12, %s668
        $region84: #{bert_ml_clf2_forward.1} parent=39 // pred_fallthru
          _
        // Predicated region
        $region85: #{bert_ml_clf2_forward.1} parent=39 // pred_check
          %p670 = pneg %p389
        $region86: #{bert_ml_clf2_forward.1} parent=39 // pred_check_branch
          %672 = sbr.rel (%p670) target = $region88
        $region87: #{bert_ml_clf2_forward.1} parent=39 // pred_region
          %p673 = scmp.lt.s32.totalorder %s37, 1
          %s674 = scalar_select %p673, %s37, 1
          %s675 = scalar_lea.vmem %s13, %s674
        $region88: #{bert_ml_clf2_forward.1} parent=39 // pred_fallthru
          _
        // Predicated region
        $region89: #{bert_ml_clf2_forward.1} parent=39 // pred_check
          %p676 = pneg %p415
        $region90: #{bert_ml_clf2_forward.1} parent=39 // pred_check_branch
          %678 = sbr.rel (%p676) target = $region92
        $region91: #{bert_ml_clf2_forward.1} parent=39 // pred_region
          %p679 = scmp.lt.s32.totalorder %s37, 1
          %s680 = scalar_select %p679, %s37, 1
          %s681 = scalar_lea.vmem %s14, %s680
        $region92: #{bert_ml_clf2_forward.1} parent=39 // pred_fallthru
          _
        // Predicated region
        $region93: #{bert_ml_clf2_forward.1} parent=39 // pred_check
          %p682 = pneg %p441
        $region94: #{bert_ml_clf2_forward.1} parent=39 // pred_check_branch
          %684 = sbr.rel (%p682) target = $region96
        $region95: #{bert_ml_clf2_forward.1} parent=39 // pred_region
          %p685 = scmp.lt.s32.totalorder %s37, 1
          %s686 = scalar_select %p685, %s37, 1
          %s687 = scalar_lea.vmem %s15, %s686
        $region96: #{bert_ml_clf2_forward.1} parent=39 // pred_fallthru
          _
      $region40: #{bert_ml_clf2_forward.1} parent=5 // pred_fallthru
        _
      %p688 = scmp.le.s32.totalorder 1, %s29
      %p689 = scmp.lt.s32.totalorder %s29, 5
      %p690 = pnand %p688, %p689
      %p691 = pneg %p690
      // Predicated region
      $region97: #{bert_ml_clf2_forward.1} parent=5 // pred_check
        _
      $region98: #{bert_ml_clf2_forward.1} parent=5 // pred_check_branch
        %693 = sbr.rel (%p690) target = $region100
      $region99: #{bert_ml_clf2_forward.1} parent=5 // pred_region
        %s694 = ssub.s32 %s29, 1
        %p695 = scmp.lt.s32.totalorder %s38, 1
        %s696 = scalar_select %p695, %s38, 1
        %s697 = smul.addr %s696, 8
        %s698 = scalar_lea.vmem %s0, %s697
        %p699 = pneg %p67
        %p700 = pneg %p64
        %p701 = scmp.lt.s32.totalorder %s38, 1
        %s702 = scalar_select %p701, %s38, 1
        %s703 = scalar_lea.vmem %s1, %s702
        %p704 = pneg %p93
        %p705 = pneg %p90
        %p706 = pneg %p114
        %p707 = pneg %p111
        %p708 = pneg %p135
        %p709 = pneg %p132
        %p710 = scmp.lt.s32.totalorder %s39, 1
        %s711 = scalar_select %p710, %s39, 1
        %s712 = smul.addr %s711, 24
        %s713 = smul.addr %s712, 4
        %s714 = scalar_lea.vmem %s4, %s713
        %p715 = pneg %p161
        %p716 = pneg %p158
        %p717 = scmp.lt.s32.totalorder %s39, 1
        %s718 = scalar_select %p717, %s39, 1
        %s719 = smul.addr %s718, 6
        %s720 = scalar_lea.vmem %s5, %s719
        %p721 = pneg %p187
        %p722 = pneg %p184
        %p723 = scmp.lt.s32.totalorder %s39, 1
        %s724 = scalar_select %p723, %s39, 1
        %s725 = smul.addr %s724, 4
        %s726 = smul.addr %s725, 4
        %s727 = scalar_lea.vmem %s6, %s726
        %p728 = pneg %p213
        %p729 = pneg %p210
        %p730 = scmp.lt.s32.totalorder %s39, 1
        %s731 = scalar_select %p730, %s39, 1
        %s732 = scalar_lea.vmem %s7, %s731
        %p733 = pneg %p239
        %p734 = pneg %p236
        %p735 = scmp.lt.s32.totalorder %s39, 1
        %s736 = scalar_select %p735, %s39, 1
        %s737 = smul.addr %s736, 4
        %s738 = smul.addr %s737, 4
        %s739 = scalar_lea.vmem %s8, %s738
        %p740 = pneg %p265
        %p741 = pneg %p262
        %p742 = scmp.lt.s32.totalorder %s39, 1
        %s743 = scalar_select %p742, %s39, 1
        %s744 = scalar_lea.vmem %s9, %s743
        %p745 = pneg %p291
        %p746 = pneg %p288
        %p747 = scmp.lt.s32.totalorder %s39, 1
        %s748 = scalar_select %p747, %s39, 1
        %s749 = smul.addr %s748, 8
        %s750 = smul.addr %s749, 4
        %s751 = scalar_lea.vmem %s10, %s750
        %p752 = pneg %p317
        %p753 = pneg %p314
        %p754 = scmp.lt.s32.totalorder %s39, 1
        %s755 = scalar_select %p754, %s39, 1
        %s756 = scalar_lea.vmem %s11, %s755
        %p757 = pneg %p343
        %p758 = pneg %p340
        %p759 = scmp.lt.s32.totalorder %s39, 1
        %s760 = scalar_select %p759, %s39, 1
        %s761 = scalar_lea.vmem %s12, %s760
        %p762 = pneg %p369
        %p763 = pneg %p366
        %p764 = scmp.lt.s32.totalorder %s39, 1
        %s765 = scalar_select %p764, %s39, 1
        %s766 = scalar_lea.vmem %s13, %s765
        %p767 = pneg %p395
        %p768 = pneg %p392
        %p769 = scmp.lt.s32.totalorder %s39, 1
        %s770 = scalar_select %p769, %s39, 1
        %s771 = scalar_lea.vmem %s14, %s770
        %p772 = pneg %p421
        %p773 = pneg %p418
        %p774 = scmp.lt.s32.totalorder %s39, 1
        %s775 = scalar_select %p774, %s39, 1
        %s776 = scalar_lea.vmem %s15, %s775
        %p777 = pneg %p447
        %p778 = pneg %p444
        %p779 = pneg %p468
        %p780 = pneg %p465
        %p781 = pneg %p489
        %p782 = pneg %p486
        %p783 = pneg %p510
        %p784 = pneg %p507
        %p785 = pneg %p531
        %p786 = pneg %p528
        %p787 = pneg %p557
        %p788 = pneg %p554
        %s789 = sand.u32 %s544, 1
        %s790 = scalar_lea.sflag [#allocation4], %s789
        %s791 = sand.u32 %s544, 1
        %s792 = scalar_lea.vmem [#allocation3], %s791
        %p793 = scmp.lt.s32.totalorder %s38, 1
        %s794 = scalar_select %p793, %s38, 1
        %s795 = smul.addr %s794, 8
        %s796 = scalar_lea.vmem %s0, %s795
        %p797 = scmp.lt.s32.totalorder %s38, 1
        %s798 = scalar_select %p797, %s38, 1
        %s799 = scalar_lea.vmem %s1, %s798
        %p800 = scmp.lt.s32.totalorder %s39, 1
        %s801 = scalar_select %p800, %s39, 1
        %s802 = smul.addr %s801, 24
        %s803 = smul.addr %s802, 4
        %s804 = scalar_lea.vmem %s4, %s803
        %p805 = scmp.lt.s32.totalorder %s39, 1
        %s806 = scalar_select %p805, %s39, 1
        %s807 = smul.addr %s806, 6
        %s808 = scalar_lea.vmem %s5, %s807
        %p809 = scmp.lt.s32.totalorder %s39, 1
        %s810 = scalar_select %p809, %s39, 1
        %s811 = smul.addr %s810, 4
        %s812 = smul.addr %s811, 4
        %s813 = scalar_lea.vmem %s6, %s812
        %p814 = scmp.lt.s32.totalorder %s39, 1
        %s815 = scalar_select %p814, %s39, 1
        %s816 = scalar_lea.vmem %s7, %s815
        %p817 = scmp.lt.s32.totalorder %s39, 1
        %s818 = scalar_select %p817, %s39, 1
        %s819 = smul.addr %s818, 4
        %s820 = smul.addr %s819, 4
        %s821 = scalar_lea.vmem %s8, %s820
        %p822 = scmp.lt.s32.totalorder %s39, 1
        %s823 = scalar_select %p822, %s39, 1
        %s824 = scalar_lea.vmem %s9, %s823
        %p825 = scmp.lt.s32.totalorder %s39, 1
        %s826 = scalar_select %p825, %s39, 1
        %s827 = smul.addr %s826, 8
        %s828 = smul.addr %s827, 4
        %s829 = scalar_lea.vmem %s10, %s828
        %p830 = scmp.lt.s32.totalorder %s39, 1
        %s831 = scalar_select %p830, %s39, 1
        %s832 = scalar_lea.vmem %s11, %s831
        %p833 = scmp.lt.s32.totalorder %s39, 1
        %s834 = scalar_select %p833, %s39, 1
        %s835 = scalar_lea.vmem %s12, %s834
        %p836 = scmp.lt.s32.totalorder %s39, 1
        %s837 = scalar_select %p836, %s39, 1
        %s838 = scalar_lea.vmem %s13, %s837
        %p839 = scmp.lt.s32.totalorder %s39, 1
        %s840 = scalar_select %p839, %s39, 1
        %s841 = scalar_lea.vmem %s14, %s840
        %p842 = scmp.lt.s32.totalorder %s39, 1
        %s843 = scalar_select %p842, %s39, 1
        %s844 = scalar_lea.vmem %s15, %s843
        %p846 = scmp.eq.s32.totalorder %s39, 0
        // Predicated region
        $region101: #{bert_ml_clf2_forward.1} parent=99 // pred_check
          %p847 = pneg %p846
        $region102: #{bert_ml_clf2_forward.1} parent=99 // pred_check_branch
          %849 = sbr.rel (%p847) target = $region104
        $region103: #{bert_ml_clf2_forward.1} parent=99 // pred_region
          %v850 = vld [vmem:[%s796] sm:$0xff]
          %v851 = vld [vmem:[%s2] sm:$0x1]
          %v852 = vld [vmem:[%s3] sm:$0x1]
          %vm853 = vcmask 261120
          %v854 = vsel %vm853, %v850, 0.0
          %855 = vadd.xlane.f32.xlu0 %v854
          %v856 = vpop.xlane.xlu0 %855
          %v857 = vrcp.pop 32.0
          %v858 = vmul.f32 %v856, %v857
          %v859 = vsub.f32 %v850, %v858
          %v860 = vmul.f32 %v859, %v859
          %v861 = vsel %vm853, %v860, 0.0
          %862 = vadd.xlane.f32.xlu0 %v861
          %v863 = vpop.xlane.xlu0 %862
          %v864 = vmul.f32 %v863, %v857
          %v865 = vadd.f32 %v864, 1e-12
          %v866 = vrsqrt.pop %v865
          %v867 = vmul.f32 %v859, %v866
          %v869 = vlaneseq
          %v870 = vshrl.u32 %v869, 7
          %v871 = vsub.s32 0, %v870
          %v872 = vrot.slane %v851, %v871
          %v874 = vmul.f32 %v867, %v872
          %v876 = vlaneseq
          %v877 = vshrl.u32 %v876, 7
          %v878 = vsub.s32 0, %v877
          %v879 = vrot.slane %v852, %v878
          %v881 = vadd.f32 %v874, %v879
          %882 = vst.msk [vmem:[#allocation2] sm:$0xff] %vm853, %v881
        $region104: #{bert_ml_clf2_forward.1} parent=99 // pred_fallthru
          _
        %v883 = vld [vmem:[#allocation2] sm:$0xff]
        %v884 = vpack.c.bf16 %v883, %v883
        %v885 = vld [vmem:[%s804] sm:$0xf]
        %v886 = vld [vmem:[%s804 + $0x4] sm:$0xf]
        %v887 = vld [vmem:[%s804 + $0x8] sm:$0xf]
        %v888 = vld [vmem:[%s804 + $0xc] sm:$0xf]
        %v889 = vld [vmem:[%s804 + $0x10] sm:$0xf]
        %v890 = vld [vmem:[%s804 + $0x14] sm:$0xf]
        %v891 = vld [vmem:[%s804 + $0x18] sm:$0xf]
        %v892 = vld [vmem:[%s804 + $0x1c] sm:$0xf]
        %v893 = vld [vmem:[%s804 + $0x20] sm:$0xf]
        %v894 = vld [vmem:[%s804 + $0x24] sm:$0xf]
        %v895 = vld [vmem:[%s804 + $0x28] sm:$0xf]
        %v896 = vld [vmem:[%s804 + $0x2c] sm:$0xf]
        %v897 = vld [vmem:[%s804 + $0x30] sm:$0xf]
        %v898 = vld [vmem:[%s804 + $0x34] sm:$0xf]
        %v899 = vld [vmem:[%s804 + $0x38] sm:$0xf]
        %v900 = vld [vmem:[%s804 + $0x3c] sm:$0xf]
        %v901 = vld [vmem:[%s804 + $0x40] sm:$0xf]
        %v902 = vld [vmem:[%s804 + $0x44] sm:$0xf]
        %v903 = vld [vmem:[%s804 + $0x48] sm:$0xf]
        %v904 = vld [vmem:[%s804 + $0x4c] sm:$0xf]
        %v905 = vld [vmem:[%s804 + $0x50] sm:$0xf]
        %v906 = vld [vmem:[%s804 + $0x54] sm:$0xf]
        %v907 = vld [vmem:[%s804 + $0x58] sm:$0xf]
        %v908 = vld [vmem:[%s804 + $0x5c] sm:$0xf]
        %v909 = vld [vmem:[%s808] sm:$0x1]
        %v910 = vld [vmem:[%s808 + $0x1] sm:$0x1]
        %v911 = vld [vmem:[%s808 + $0x2] sm:$0x1]
        %v912 = vld [vmem:[%s808 + $0x3] sm:$0x1]
        %v913 = vld [vmem:[%s808 + $0x4] sm:$0x1]
        %v914 = vld [vmem:[%s808 + $0x5] sm:$0x1]
        %v921 = vlaneseq
        %v922 = vshrl.u32 %v921, 7
        %v923 = vsub.s32 0, %v922
        %v924 = vrot.slane %v909, %v923
        %v925 = vlaneseq
        %v926 = vshrl.u32 %v925, 7
        %v927 = vsub.s32 0, %v926
        %v928 = vrot.slane %v910, %v927
        %v929 = vlaneseq
        %v930 = vshrl.u32 %v929, 7
        %v931 = vsub.s32 0, %v930
        %v932 = vrot.slane %v911, %v931
        %v933 = vlaneseq
        %v934 = vshrl.u32 %v933, 7
        %v935 = vsub.s32 0, %v934
        %v936 = vrot.slane %v912, %v935
        %v937 = vlaneseq
        %v938 = vshrl.u32 %v937, 7
        %v939 = vsub.s32 0, %v938
        %v940 = vrot.slane %v913, %v939
        %v941 = vlaneseq
        %v942 = vshrl.u32 %v941, 7
        %v943 = vsub.s32 0, %v942
        %v944 = vrot.slane %v914, %v943
        %v955 = vunpack.c.l.b16 %v885
        %v956 = vunpack.c.l.b16 %v886
        %v957 = vunpack.c.l.b16 %v887
        %v958 = vunpack.c.l.b16 %v888
        %v959 = vpack.c.b16 %v956, %v955
        %v960 = vpack.c.b16 %v958, %v957
        %vm963 = vcmask 261120
        %v965 = vsel %vm963, %v884, 0
        %967 = vmatprep.subr.bf16.mxu0 0
        %968 = vmatpush1.bf16.msra.mxu0 %v959
        %969 = vmatprep.subr.bf16.mxu0 0
        %970 = vmatpush1.bf16.msra.mxu0 %v960
        %971 = vmatprep.subr.bf16.mxu0 0
        %972 = vmatpush1.bf16.msra.mxu0 0
        %973 = vmatprep.subr.bf16.mxu0 0
        %974 = vmatpush1.bf16.msra.mxu0 0
        %975 = vmatprep.subr.bf16.mxu0 0
        %976 = vmatpush1.bf16.msra.mxu0 0
        %977 = vmatprep.subr.bf16.mxu0 0
        %978 = vmatpush1.bf16.msra.mxu0 0
        %979 = vmatprep.subr.bf16.mxu0 0
        %980 = vmatpush1.bf16.msra.mxu0 0
        %981 = vmatprep.subr.bf16.mxu0 0
        %982 = vmatpush1.bf16.msra.mxu0 0
        %983 = vmatprep.subr.bf16.mxu0 0
        %984 = vmatpush1.bf16.msra.mxu0 0
        %985 = vmatprep.subr.bf16.mxu0 0
        %986 = vmatpush1.bf16.msra.mxu0 0
        %987 = vmatprep.subr.bf16.mxu0 0
        %988 = vmatpush1.bf16.msra.mxu0 0
        %989 = vmatprep.subr.bf16.mxu0 0
        %990 = vmatpush1.bf16.msra.mxu0 0
        %991 = vmatprep.subr.bf16.mxu0 0
        %992 = vmatpush1.bf16.msra.mxu0 0
        %993 = vmatprep.subr.bf16.mxu0 0
        %994 = vmatpush1.bf16.msra.mxu0 0
        %995 = vmatprep.subr.bf16.mxu0 0
        %996 = vmatpush1.bf16.msra.mxu0 0
        %997 = vmatprep.subr.bf16.mxu0 0
        %998 = vmatpush1.bf16.msra.mxu0 0
        %999 = vmatprep.mubr.bf16.mxu0 0
        %1000 = vmatmul.mubr.bf16.gmra.mrb[0].mxu0 %v965
        %v1001 = vpop.f32.mrb[0].mxu0
        %v1002 = vadd.f32 %v924, %v1001
        %v1003 = vpop.f32.mrb[0].mxu0
        %v1004 = vpop.f32.mrb[0].mxu0
        %v1005 = vpop.f32.mrb[0].mxu0
        %1006 = vdwg.mxu0
        %v1011 = vunpack.c.l.b16 %v889
        %v1012 = vunpack.c.l.b16 %v890
        %v1013 = vunpack.c.l.b16 %v891
        %v1014 = vunpack.c.l.b16 %v892
        %v1015 = vpack.c.b16 %v1012, %v1011
        %v1016 = vpack.c.b16 %v1014, %v1013
        %1019 = vmatprep.subr.bf16.mxu0 0
        %1020 = vmatpush1.bf16.msra.mxu0 %v1015
        %1021 = vmatprep.subr.bf16.mxu0 0
        %1022 = vmatpush1.bf16.msra.mxu0 %v1016
        %1023 = vmatprep.subr.bf16.mxu0 0
        %1024 = vmatpush1.bf16.msra.mxu0 0
        %1025 = vmatprep.subr.bf16.mxu0 0
        %1026 = vmatpush1.bf16.msra.mxu0 0
        %1027 = vmatprep.subr.bf16.mxu0 0
        %1028 = vmatpush1.bf16.msra.mxu0 0
        %1029 = vmatprep.subr.bf16.mxu0 0
        %1030 = vmatpush1.bf16.msra.mxu0 0
        %1031 = vmatprep.subr.bf16.mxu0 0
        %1032 = vmatpush1.bf16.msra.mxu0 0
        %1033 = vmatprep.subr.bf16.mxu0 0
        %1034 = vmatpush1.bf16.msra.mxu0 0
        %1035 = vmatprep.subr.bf16.mxu0 0
        %1036 = vmatpush1.bf16.msra.mxu0 0
        %1037 = vmatprep.subr.bf16.mxu0 0
        %1038 = vmatpush1.bf16.msra.mxu0 0
        %1039 = vmatprep.subr.bf16.mxu0 0
        %1040 = vmatpush1.bf16.msra.mxu0 0
        %1041 = vmatprep.subr.bf16.mxu0 0
        %1042 = vmatpush1.bf16.msra.mxu0 0
        %1043 = vmatprep.subr.bf16.mxu0 0
        %1044 = vmatpush1.bf16.msra.mxu0 0
        %1045 = vmatprep.subr.bf16.mxu0 0
        %1046 = vmatpush1.bf16.msra.mxu0 0
        %1047 = vmatprep.subr.bf16.mxu0 0
        %1048 = vmatpush1.bf16.msra.mxu0 0
        %1049 = vmatprep.subr.bf16.mxu0 0
        %1050 = vmatpush1.bf16.msra.mxu0 0
        %1051 = vmatprep.mubr.bf16.mxu0 0
        %1052 = vmatmul.mubr.bf16.gmra.mrb[0].mxu0 %v965
        %v1053 = vpop.f32.mrb[0].mxu0
        %v1054 = vadd.f32 %v928, %v1053
        %v1055 = vpop.f32.mrb[0].mxu0
        %v1056 = vpop.f32.mrb[0].mxu0
        %v1057 = vpop.f32.mrb[0].mxu0
        %1058 = vdwg.mxu0
        %v1063 = vunpack.c.l.b16 %v893
        %v1064 = vunpack.c.l.b16 %v894
        %v1065 = vunpack.c.l.b16 %v895
        %v1066 = vunpack.c.l.b16 %v896
        %v1067 = vpack.c.b16 %v1064, %v1063
        %v1068 = vpack.c.b16 %v1066, %v1065
        %1071 = vmatprep.subr.bf16.mxu0 0
        %1072 = vmatpush1.bf16.msra.mxu0 %v1067
        %1073 = vmatprep.subr.bf16.mxu0 0
        %1074 = vmatpush1.bf16.msra.mxu0 %v1068
        %1075 = vmatprep.subr.bf16.mxu0 0
        %1076 = vmatpush1.bf16.msra.mxu0 0
        %1077 = vmatprep.subr.bf16.mxu0 0
        %1078 = vmatpush1.bf16.msra.mxu0 0
        %1079 = vmatprep.subr.bf16.mxu0 0
        %1080 = vmatpush1.bf16.msra.mxu0 0
        %1081 = vmatprep.subr.bf16.mxu0 0
        %1082 = vmatpush1.bf16.msra.mxu0 0
        %1083 = vmatprep.subr.bf16.mxu0 0
        %1084 = vmatpush1.bf16.msra.mxu0 0
        %1085 = vmatprep.subr.bf16.mxu0 0
        %1086 = vmatpush1.bf16.msra.mxu0 0
        %1087 = vmatprep.subr.bf16.mxu0 0
        %1088 = vmatpush1.bf16.msra.mxu0 0
        %1089 = vmatprep.subr.bf16.mxu0 0
        %1090 = vmatpush1.bf16.msra.mxu0 0
        %1091 = vmatprep.subr.bf16.mxu0 0
        %1092 = vmatpush1.bf16.msra.mxu0 0
        %1093 = vmatprep.subr.bf16.mxu0 0
        %1094 = vmatpush1.bf16.msra.mxu0 0
        %1095 = vmatprep.subr.bf16.mxu0 0
        %1096 = vmatpush1.bf16.msra.mxu0 0
        %1097 = vmatprep.subr.bf16.mxu0 0
        %1098 = vmatpush1.bf16.msra.mxu0 0
        %1099 = vmatprep.subr.bf16.mxu0 0
        %1100 = vmatpush1.bf16.msra.mxu0 0
        %1101 = vmatprep.subr.bf16.mxu0 0
        %1102 = vmatpush1.bf16.msra.mxu0 0
        %1103 = vmatprep.mubr.bf16.mxu0 0
        %1104 = vmatmul.mubr.bf16.gmra.mrb[0].mxu0 %v965
        %v1105 = vpop.f32.mrb[0].mxu0
        %v1106 = vadd.f32 %v932, %v1105
        %v1107 = vpop.f32.mrb[0].mxu0
        %v1108 = vpop.f32.mrb[0].mxu0
        %v1109 = vpop.f32.mrb[0].mxu0
        %1110 = vdwg.mxu0
        %v1115 = vunpack.c.l.b16 %v897
        %v1116 = vunpack.c.l.b16 %v898
        %v1117 = vunpack.c.l.b16 %v899
        %v1118 = vunpack.c.l.b16 %v900
        %v1119 = vpack.c.b16 %v1116, %v1115
        %v1120 = vpack.c.b16 %v1118, %v1117
        %1123 = vmatprep.subr.bf16.mxu0 0
        %1124 = vmatpush1.bf16.msra.mxu0 %v1119
        %1125 = vmatprep.subr.bf16.mxu0 0
        %1126 = vmatpush1.bf16.msra.mxu0 %v1120
        %1127 = vmatprep.subr.bf16.mxu0 0
        %1128 = vmatpush1.bf16.msra.mxu0 0
        %1129 = vmatprep.subr.bf16.mxu0 0
        %1130 = vmatpush1.bf16.msra.mxu0 0
        %1131 = vmatprep.subr.bf16.mxu0 0
        %1132 = vmatpush1.bf16.msra.mxu0 0
        %1133 = vmatprep.subr.bf16.mxu0 0
        %1134 = vmatpush1.bf16.msra.mxu0 0
        %1135 = vmatprep.subr.bf16.mxu0 0
        %1136 = vmatpush1.bf16.msra.mxu0 0
        %1137 = vmatprep.subr.bf16.mxu0 0
        %1138 = vmatpush1.bf16.msra.mxu0 0
        %1139 = vmatprep.subr.bf16.mxu0 0
        %1140 = vmatpush1.bf16.msra.mxu0 0
        %1141 = vmatprep.subr.bf16.mxu0 0
        %1142 = vmatpush1.bf16.msra.mxu0 0
        %1143 = vmatprep.subr.bf16.mxu0 0
        %1144 = vmatpush1.bf16.msra.mxu0 0
        %1145 = vmatprep.subr.bf16.mxu0 0
        %1146 = vmatpush1.bf16.msra.mxu0 0
        %1147 = vmatprep.subr.bf16.mxu0 0
        %1148 = vmatpush1.bf16.msra.mxu0 0
        %1149 = vmatprep.subr.bf16.mxu0 0
        %1150 = vmatpush1.bf16.msra.mxu0 0
        %1151 = vmatprep.subr.bf16.mxu0 0
        %1152 = vmatpush1.bf16.msra.mxu0 0
        %1153 = vmatprep.subr.bf16.mxu0 0
        %1154 = vmatpush1.bf16.msra.mxu0 0
        %1155 = vmatprep.mubr.bf16.mxu0 0
        %1156 = vmatmul.mubr.bf16.gmra.mrb[0].mxu0 %v965
        %v1157 = vpop.f32.mrb[0].mxu0
        %v1158 = vadd.f32 %v936, %v1157
        %v1159 = vpop.f32.mrb[0].mxu0
        %v1160 = vpop.f32.mrb[0].mxu0
        %v1161 = vpop.f32.mrb[0].mxu0
        %1162 = vdwg.mxu0
        %v1167 = vunpack.c.l.b16 %v901
        %v1168 = vunpack.c.l.b16 %v902
        %v1169 = vunpack.c.l.b16 %v903
        %v1170 = vunpack.c.l.b16 %v904
        %v1171 = vpack.c.b16 %v1168, %v1167
        %v1172 = vpack.c.b16 %v1170, %v1169
        %1175 = vmatprep.subr.bf16.mxu0 0
        %1176 = vmatpush1.bf16.msra.mxu0 %v1171
        %1177 = vmatprep.subr.bf16.mxu0 0
        %1178 = vmatpush1.bf16.msra.mxu0 %v1172
        %1179 = vmatprep.subr.bf16.mxu0 0
        %1180 = vmatpush1.bf16.msra.mxu0 0
        %1181 = vmatprep.subr.bf16.mxu0 0
        %1182 = vmatpush1.bf16.msra.mxu0 0
        %1183 = vmatprep.subr.bf16.mxu0 0
        %1184 = vmatpush1.bf16.msra.mxu0 0
        %1185 = vmatprep.subr.bf16.mxu0 0
        %1186 = vmatpush1.bf16.msra.mxu0 0
        %1187 = vmatprep.subr.bf16.mxu0 0
        %1188 = vmatpush1.bf16.msra.mxu0 0
        %1189 = vmatprep.subr.bf16.mxu0 0
        %1190 = vmatpush1.bf16.msra.mxu0 0
        %1191 = vmatprep.subr.bf16.mxu0 0
        %1192 = vmatpush1.bf16.msra.mxu0 0
        %1193 = vmatprep.subr.bf16.mxu0 0
        %1194 = vmatpush1.bf16.msra.mxu0 0
        %1195 = vmatprep.subr.bf16.mxu0 0
        %1196 = vmatpush1.bf16.msra.mxu0 0
        %1197 = vmatprep.subr.bf16.mxu0 0
        %1198 = vmatpush1.bf16.msra.mxu0 0
        %1199 = vmatprep.subr.bf16.mxu0 0
        %1200 = vmatpush1.bf16.msra.mxu0 0
        %1201 = vmatprep.subr.bf16.mxu0 0
        %1202 = vmatpush1.bf16.msra.mxu0 0
        %1203 = vmatprep.subr.bf16.mxu0 0
        %1204 = vmatpush1.bf16.msra.mxu0 0
        %1205 = vmatprep.subr.bf16.mxu0 0
        %1206 = vmatpush1.bf16.msra.mxu0 0
        %1207 = vmatprep.mubr.bf16.mxu0 0
        %1208 = vmatmul.mubr.bf16.gmra.mrb[0].mxu0 %v965
        %v1209 = vpop.f32.mrb[0].mxu0
        %v1210 = vadd.f32 %v940, %v1209
        %v1211 = vpop.f32.mrb[0].mxu0
        %v1212 = vpop.f32.mrb[0].mxu0
        %v1213 = vpop.f32.mrb[0].mxu0
        %1214 = vdwg.mxu0
        %v1219 = vunpack.c.l.b16 %v905
        %v1220 = vunpack.c.l.b16 %v906
        %v1221 = vunpack.c.l.b16 %v907
        %v1222 = vunpack.c.l.b16 %v908
        %v1223 = vpack.c.b16 %v1220, %v1219
        %v1224 = vpack.c.b16 %v1222, %v1221
        %1227 = vmatprep.subr.bf16.mxu0 0
        %1228 = vmatpush1.bf16.msra.mxu0 %v1223
        %1229 = vmatprep.subr.bf16.mxu0 0
        %1230 = vmatpush1.bf16.msra.mxu0 %v1224
        %1231 = vmatprep.subr.bf16.mxu0 0
        %1232 = vmatpush1.bf16.msra.mxu0 0
        %1233 = vmatprep.subr.bf16.mxu0 0
        %1234 = vmatpush1.bf16.msra.mxu0 0
        %1235 = vmatprep.subr.bf16.mxu0 0
        %1236 = vmatpush1.bf16.msra.mxu0 0
        %1237 = vmatprep.subr.bf16.mxu0 0
        %1238 = vmatpush1.bf16.msra.mxu0 0
        %1239 = vmatprep.subr.bf16.mxu0 0
        %1240 = vmatpush1.bf16.msra.mxu0 0
        %1241 = vmatprep.subr.bf16.mxu0 0
        %1242 = vmatpush1.bf16.msra.mxu0 0
        %1243 = vmatprep.subr.bf16.mxu0 0
        %1244 = vmatpush1.bf16.msra.mxu0 0
        %1245 = vmatprep.subr.bf16.mxu0 0
        %1246 = vmatpush1.bf16.msra.mxu0 0
        %1247 = vmatprep.subr.bf16.mxu0 0
        %1248 = vmatpush1.bf16.msra.mxu0 0
        %1249 = vmatprep.subr.bf16.mxu0 0
        %1250 = vmatpush1.bf16.msra.mxu0 0
        %1251 = vmatprep.subr.bf16.mxu0 0
        %1252 = vmatpush1.bf16.msra.mxu0 0
        %1253 = vmatprep.subr.bf16.mxu0 0
        %1254 = vmatpush1.bf16.msra.mxu0 0
        %1255 = vmatprep.subr.bf16.mxu0 0
        %1256 = vmatpush1.bf16.msra.mxu0 0
        %1257 = vmatprep.subr.bf16.mxu0 0
        %1258 = vmatpush1.bf16.msra.mxu0 0
        %1259 = vmatprep.mubr.bf16.mxu0 0
        %1260 = vmatmul.mubr.bf16.gmra.mrb[0].mxu0 %v965
        %v1261 = vpop.f32.mrb[0].mxu0
        %v1262 = vadd.f32 %v944, %v1261
        %v1263 = vpop.f32.mrb[0].mxu0
        %v1264 = vpop.f32.mrb[0].mxu0
        %v1265 = vpop.f32.mrb[0].mxu0
        %1266 = vdwg.mxu0
        %v1267 = vpack.c.bf16 %v1002, %v1002
        %v1268 = vpack.c.bf16 %v1054, %v1054
        %v1269 = vpack.c.bf16 %v1106, %v1106
        %v1270 = vpack.c.bf16 %v1158, %v1158
        %v1271 = vld [vmem:[%s799] sm:$0x1]
        %v1273 = vlaneseq
        %v1274 = vshrl.u32 %v1273, 7
        %v1275 = vsub.s32 0, %v1274
        %v1276 = vrot.slane %v1271, %v1275
        %vm1278 = vcmask 130048
        %v1280 = vsel %vm1278, %v1267, 0
        %v1283 = vsel %vm1278, %v1269, 0
        %1285 = vmatprep.subr.bf16.mxu0 0
        %1286 = vmatpush1.bf16.xpose.msra.mxu0 %v1283
        %1287 = vmatprep.subr.bf16.mxu0 0
        %1288 = vmatpush1.bf16.xpose.msra.mxu0 0
        %1289 = vmatprep.subr.bf16.mxu0 0
        %1290 = vmatpush1.bf16.xpose.msra.mxu0 0
        %1291 = vmatprep.subr.bf16.mxu0 0
        %1292 = vmatpush1.bf16.xpose.msra.mxu0 0
        %1293 = vmatprep.subr.bf16.mxu0 0
        %1294 = vmatpush1.bf16.xpose.msra.mxu0 0
        %1295 = vmatprep.subr.bf16.mxu0 0
        %1296 = vmatpush1.bf16.xpose.msra.mxu0 0
        %1297 = vmatprep.subr.bf16.mxu0 0
        %1298 = vmatpush1.bf16.xpose.msra.mxu0 0
        %1299 = vmatprep.subr.bf16.mxu0 0
        %1300 = vmatpush1.bf16.xpose.msra.mxu0 0
        %1301 = vmatprep.subr.bf16.mxu0 0
        %1302 = vmatpush1.bf16.xpose.msra.mxu0 0
        %1303 = vmatprep.subr.bf16.mxu0 0
        %1304 = vmatpush1.bf16.xpose.msra.mxu0 0
        %1305 = vmatprep.subr.bf16.mxu0 0
        %1306 = vmatpush1.bf16.xpose.msra.mxu0 0
        %1307 = vmatprep.subr.bf16.mxu0 0
        %1308 = vmatpush1.bf16.xpose.msra.mxu0 0
        %1309 = vmatprep.subr.bf16.mxu0 0
        %1310 = vmatpush1.bf16.xpose.msra.mxu0 0
        %1311 = vmatprep.subr.bf16.mxu0 0
        %1312 = vmatpush1.bf16.xpose.msra.mxu0 0
        %1313 = vmatprep.subr.bf16.mxu0 0
        %1314 = vmatpush1.bf16.xpose.msra.mxu0 0
        %1315 = vmatprep.subr.bf16.mxu0 0
        %1316 = vmatpush1.bf16.xpose.msra.mxu0 0
        %1317 = vmatprep.mubr.bf16.mxu0 0
        %1318 = vmatmul.mubr.bf16.gmra.mrb[0].mxu0 %v1280
        %v1319 = vpop.f32.mrb[0].mxu0
        %v1320 = vadd.f32 %v1276, %v1319
        %v1321 = vpop.f32.mrb[0].mxu0
        %v1322 = vpop.f32.mrb[0].mxu0
        %v1323 = vpop.f32.mrb[0].mxu0
        %1324 = vdwg.mxu0
        %v1326 = vsel %vm1278, %v1268, 0
        %v1329 = vsel %vm1278, %v1270, 0
        %1331 = vmatprep.subr.bf16.mxu0 0
        %1332 = vmatpush1.bf16.xpose.msra.mxu0 %v1329
        %1333 = vmatprep.subr.bf16.mxu0 0
        %1334 = vmatpush1.bf16.xpose.msra.mxu0 0
        %1335 = vmatprep.subr.bf16.mxu0 0
        %1336 = vmatpush1.bf16.xpose.msra.mxu0 0
        %1337 = vmatprep.subr.bf16.mxu0 0
        %1338 = vmatpush1.bf16.xpose.msra.mxu0 0
        %1339 = vmatprep.subr.bf16.mxu0 0
        %1340 = vmatpush1.bf16.xpose.msra.mxu0 0
        %1341 = vmatprep.subr.bf16.mxu0 0
        %1342 = vmatpush1.bf16.xpose.msra.mxu0 0
        %1343 = vmatprep.subr.bf16.mxu0 0
        %1344 = vmatpush1.bf16.xpose.msra.mxu0 0
        %1345 = vmatprep.subr.bf16.mxu0 0
        %1346 = vmatpush1.bf16.xpose.msra.mxu0 0
        %1347 = vmatprep.subr.bf16.mxu0 0
        %1348 = vmatpush1.bf16.xpose.msra.mxu0 0
        %1349 = vmatprep.subr.bf16.mxu0 0
        %1350 = vmatpush1.bf16.xpose.msra.mxu0 0
        %1351 = vmatprep.subr.bf16.mxu0 0
        %1352 = vmatpush1.bf16.xpose.msra.mxu0 0
        %1353 = vmatprep.subr.bf16.mxu0 0
        %1354 = vmatpush1.bf16.xpose.msra.mxu0 0
        %1355 = vmatprep.subr.bf16.mxu0 0
        %1356 = vmatpush1.bf16.xpose.msra.mxu0 0
        %1357 = vmatprep.subr.bf16.mxu0 0
        %1358 = vmatpush1.bf16.xpose.msra.mxu0 0
        %1359 = vmatprep.subr.bf16.mxu0 0
        %1360 = vmatpush1.bf16.xpose.msra.mxu0 0
        %1361 = vmatprep.subr.bf16.mxu0 0
        %1362 = vmatpush1.bf16.xpose.msra.mxu0 0
        %1363 = vmatprep.mubr.bf16.mxu0 0
        %1364 = vmatmul.mubr.bf16.gmra.mrb[0].mxu0 %v1326
        %v1365 = vpop.f32.mrb[0].mxu0
        %v1366 = vadd.f32 %v1276, %v1365
        %v1367 = vpop.f32.mrb[0].mxu0
        %v1368 = vpop.f32.mrb[0].mxu0
        %v1369 = vpop.f32.mrb[0].mxu0
        %1370 = vdwg.mxu0
        %vm1371 = vcmask 64512
        %v1372 = vsel %vm1371, %v1320, -inf
        %1373 = vmax.xlane.f32.xlu0 %v1372
        %v1374 = vpop.xlane.xlu0 %1373
        %v1375 = vsel %vm1371, %v1366, -inf
        %1376 = vmax.xlane.f32.xlu0 %v1375
        %v1377 = vpop.xlane.xlu0 %1376
        %v1378 = vsub.f32 %v1320, %v1374
        %v1379 = vsub.f32 %v1366, %v1377
        %v1380 = vmul.f32 %v1378, 1.442695
        %v1381 = vpow.pop %v1380
        %v1382 = vmul.f32 %v1379, 1.442695
        %v1383 = vpow.pop %v1382
        %v1384 = vsel %vm1371, %v1381, 0.0
        %1385 = vadd.xlane.f32.xlu0 %v1384
        %v1386 = vpop.xlane.xlu0 %1385
        %v1387 = vsel %vm1371, %v1383, 0.0
        %1388 = vadd.xlane.f32.xlu0 %v1387
        %v1389 = vpop.xlane.xlu0 %1388
        %v1390 = vrcp.pop %v1386
        %v1391 = vrcp.pop %v1389
        %v1392 = vmul.f32 %v1381, %v1390
        %v1393 = vmul.f32 %v1383, %v1391
        %v1394 = vpack.c.bf16 %v1392, %v1392
        %v1395 = vpack.c.bf16 %v1393, %v1393
        %v1396 = vpack.c.bf16 %v1210, %v1210
        %v1397 = vpack.c.bf16 %v1262, %v1262
        %v1399 = vsel %vm1371, %v1394, 0
        %vm1401 = vcmask 1043456
        %v1403 = vsel %vm1401, %v1396, 0
        %1405 = vmatprep.subr.bf16.mxu0 0
        %1406 = vmatpush1.bf16.msra.mxu0 %v1403
        %1407 = vmatprep.subr.bf16.mxu0 0
        %1408 = vmatpush1.bf16.msra.mxu0 0
        %1409 = vmatprep.subr.bf16.mxu0 0
        %1410 = vmatpush1.bf16.msra.mxu0 0
        %1411 = vmatprep.subr.bf16.mxu0 0
        %1412 = vmatpush1.bf16.msra.mxu0 0
        %1413 = vmatprep.subr.bf16.mxu0 0
        %1414 = vmatpush1.bf16.msra.mxu0 0
        %1415 = vmatprep.subr.bf16.mxu0 0
        %1416 = vmatpush1.bf16.msra.mxu0 0
        %1417 = vmatprep.subr.bf16.mxu0 0
        %1418 = vmatpush1.bf16.msra.mxu0 0
        %1419 = vmatprep.subr.bf16.mxu0 0
        %1420 = vmatpush1.bf16.msra.mxu0 0
        %1421 = vmatprep.subr.bf16.mxu0 0
        %1422 = vmatpush1.bf16.msra.mxu0 0
        %1423 = vmatprep.subr.bf16.mxu0 0
        %1424 = vmatpush1.bf16.msra.mxu0 0
        %1425 = vmatprep.subr.bf16.mxu0 0
        %1426 = vmatpush1.bf16.msra.mxu0 0
        %1427 = vmatprep.subr.bf16.mxu0 0
        %1428 = vmatpush1.bf16.msra.mxu0 0
        %1429 = vmatprep.subr.bf16.mxu0 0
        %1430 = vmatpush1.bf16.msra.mxu0 0
        %1431 = vmatprep.subr.bf16.mxu0 0
        %1432 = vmatpush1.bf16.msra.mxu0 0
        %1433 = vmatprep.subr.bf16.mxu0 0
        %1434 = vmatpush1.bf16.msra.mxu0 0
        %1435 = vmatprep.subr.bf16.mxu0 0
        %1436 = vmatpush1.bf16.msra.mxu0 0
        %1437 = vmatprep.mubr.bf16.mxu0 0
        %1438 = vmatmul.mubr.bf16.gmra.mrb[0].mxu0 %v1399
        %v1439 = vpop.f32.mrb[0].mxu0
        %v1440 = vadd.f32 0.0, %v1439
        %v1441 = vpop.f32.mrb[0].mxu0
        %v1442 = vpop.f32.mrb[0].mxu0
        %v1443 = vpop.f32.mrb[0].mxu0
        %1444 = vdwg.mxu0
        %v1446 = vsel %vm1371, %v1395, 0
        %v1449 = vsel %vm1401, %v1397, 0
        %1451 = vmatprep.subr.bf16.mxu0 0
        %1452 = vmatpush1.bf16.msra.mxu0 %v1449
        %1453 = vmatprep.subr.bf16.mxu0 0
        %1454 = vmatpush1.bf16.msra.mxu0 0
        %1455 = vmatprep.subr.bf16.mxu0 0
        %1456 = vmatpush1.bf16.msra.mxu0 0
        %1457 = vmatprep.subr.bf16.mxu0 0
        %1458 = vmatpush1.bf16.msra.mxu0 0
        %1459 = vmatprep.subr.bf16.mxu0 0
        %1460 = vmatpush1.bf16.msra.mxu0 0
        %1461 = vmatprep.subr.bf16.mxu0 0
        %1462 = vmatpush1.bf16.msra.mxu0 0
        %1463 = vmatprep.subr.bf16.mxu0 0
        %1464 = vmatpush1.bf16.msra.mxu0 0
        %1465 = vmatprep.subr.bf16.mxu0 0
        %1466 = vmatpush1.bf16.msra.mxu0 0
        %1467 = vmatprep.subr.bf16.mxu0 0
        %1468 = vmatpush1.bf16.msra.mxu0 0
        %1469 = vmatprep.subr.bf16.mxu0 0
        %1470 = vmatpush1.bf16.msra.mxu0 0
        %1471 = vmatprep.subr.bf16.mxu0 0
        %1472 = vmatpush1.bf16.msra.mxu0 0
        %1473 = vmatprep.subr.bf16.mxu0 0
        %1474 = vmatpush1.bf16.msra.mxu0 0
        %1475 = vmatprep.subr.bf16.mxu0 0
        %1476 = vmatpush1.bf16.msra.mxu0 0
        %1477 = vmatprep.subr.bf16.mxu0 0
        %1478 = vmatpush1.bf16.msra.mxu0 0
        %1479 = vmatprep.subr.bf16.mxu0 0
        %1480 = vmatpush1.bf16.msra.mxu0 0
        %1481 = vmatprep.subr.bf16.mxu0 0
        %1482 = vmatpush1.bf16.msra.mxu0 0
        %1483 = vmatprep.mubr.bf16.mxu0 0
        %1484 = vmatmul.mubr.bf16.gmra.mrb[0].mxu0 %v1446
        %v1485 = vpop.f32.mrb[0].mxu0
        %v1486 = vadd.f32 0.0, %v1485
        %v1487 = vpop.f32.mrb[0].mxu0
        %v1488 = vpop.f32.mrb[0].mxu0
        %v1489 = vpop.f32.mrb[0].mxu0
        %1490 = vdwg.mxu0
        %v1491 = vpack.c.bf16 %v1440, %v1440
        %v1492 = vpack.c.bf16 %v1486, %v1486
        %v1493 = vld [vmem:[%s813] sm:$0xf]
        %v1494 = vld [vmem:[%s813 + $0x4] sm:$0xf]
        %v1495 = vld [vmem:[%s813 + $0x8] sm:$0xf]
        %v1496 = vld [vmem:[%s813 + $0xc] sm:$0xf]
        %v1499 = vunpack.c.l.b16 %v1493
        %v1500 = vunpack.c.l.b16 %v1494
        %v1501 = vpack.c.b16 %v1500, %v1499
        %v1504 = vsel %vm1278, %v1491, 0
        %1506 = vmatprep.subr.bf16.mxu0 0
        %1507 = vmatpush1.bf16.msra.mxu0 %v1501
        %1508 = vmatprep.subr.bf16.mxu0 0
        %1509 = vmatpush1.bf16.msra.mxu0 0
        %1510 = vmatprep.subr.bf16.mxu0 0
        %1511 = vmatpush1.bf16.msra.mxu0 0
        %1512 = vmatprep.subr.bf16.mxu0 0
        %1513 = vmatpush1.bf16.msra.mxu0 0
        %1514 = vmatprep.subr.bf16.mxu0 0
        %1515 = vmatpush1.bf16.msra.mxu0 0
        %1516 = vmatprep.subr.bf16.mxu0 0
        %1517 = vmatpush1.bf16.msra.mxu0 0
        %1518 = vmatprep.subr.bf16.mxu0 0
        %1519 = vmatpush1.bf16.msra.mxu0 0
        %1520 = vmatprep.subr.bf16.mxu0 0
        %1521 = vmatpush1.bf16.msra.mxu0 0
        %1522 = vmatprep.subr.bf16.mxu0 0
        %1523 = vmatpush1.bf16.msra.mxu0 0
        %1524 = vmatprep.subr.bf16.mxu0 0
        %1525 = vmatpush1.bf16.msra.mxu0 0
        %1526 = vmatprep.subr.bf16.mxu0 0
        %1527 = vmatpush1.bf16.msra.mxu0 0
        %1528 = vmatprep.subr.bf16.mxu0 0
        %1529 = vmatpush1.bf16.msra.mxu0 0
        %1530 = vmatprep.subr.bf16.mxu0 0
        %1531 = vmatpush1.bf16.msra.mxu0 0
        %1532 = vmatprep.subr.bf16.mxu0 0
        %1533 = vmatpush1.bf16.msra.mxu0 0
        %1534 = vmatprep.subr.bf16.mxu0 0
        %1535 = vmatpush1.bf16.msra.mxu0 0
        %1536 = vmatprep.subr.bf16.mxu0 0
        %1537 = vmatpush1.bf16.msra.mxu0 0
        %1538 = vmatprep.mubr.bf16.mxu0 0
        %1539 = vmatmul.mubr.bf16.gmra.mrb[0].mxu0 %v1504
        %v1540 = vpop.f32.mrb[0].mxu0
        %v1541 = vadd.f32 0.0, %v1540
        %v1542 = vpop.f32.mrb[0].mxu0
        %v1543 = vpop.f32.mrb[0].mxu0
        %v1544 = vpop.f32.mrb[0].mxu0
        %1545 = vdwg.mxu0
        %v1548 = vunpack.c.l.b16 %v1495
        %v1549 = vunpack.c.l.b16 %v1496
        %v1550 = vpack.c.b16 %v1549, %v1548
        %v1553 = vsel %vm1278, %v1492, 0
        %1555 = vmatprep.subr.bf16.mxu0 0
        %1556 = vmatpush1.bf16.msra.mxu0 %v1550
        %1557 = vmatprep.subr.bf16.mxu0 0
        %1558 = vmatpush1.bf16.msra.mxu0 0
        %1559 = vmatprep.subr.bf16.mxu0 0
        %1560 = vmatpush1.bf16.msra.mxu0 0
        %1561 = vmatprep.subr.bf16.mxu0 0
        %1562 = vmatpush1.bf16.msra.mxu0 0
        %1563 = vmatprep.subr.bf16.mxu0 0
        %1564 = vmatpush1.bf16.msra.mxu0 0
        %1565 = vmatprep.subr.bf16.mxu0 0
        %1566 = vmatpush1.bf16.msra.mxu0 0
        %1567 = vmatprep.subr.bf16.mxu0 0
        %1568 = vmatpush1.bf16.msra.mxu0 0
        %1569 = vmatprep.subr.bf16.mxu0 0
        %1570 = vmatpush1.bf16.msra.mxu0 0
        %1571 = vmatprep.subr.bf16.mxu0 0
        %1572 = vmatpush1.bf16.msra.mxu0 0
        %1573 = vmatprep.subr.bf16.mxu0 0
        %1574 = vmatpush1.bf16.msra.mxu0 0
        %1575 = vmatprep.subr.bf16.mxu0 0
        %1576 = vmatpush1.bf16.msra.mxu0 0
        %1577 = vmatprep.subr.bf16.mxu0 0
        %1578 = vmatpush1.bf16.msra.mxu0 0
        %1579 = vmatprep.subr.bf16.mxu0 0
        %1580 = vmatpush1.bf16.msra.mxu0 0
        %1581 = vmatprep.subr.bf16.mxu0 0
        %1582 = vmatpush1.bf16.msra.mxu0 0
        %1583 = vmatprep.subr.bf16.mxu0 0
        %1584 = vmatpush1.bf16.msra.mxu0 0
        %1585 = vmatprep.subr.bf16.mxu0 0
        %1586 = vmatpush1.bf16.msra.mxu0 0
        %1587 = vmatprep.mubr.bf16.mxu0 0
        %1588 = vmatmul.mubr.bf16.gmra.mrb[0].mxu0 %v1553
        %v1589 = vpop.f32.mrb[0].mxu0
        %v1590 = vadd.f32 0.0, %v1589
        %v1591 = vpop.f32.mrb[0].mxu0
        %v1592 = vpop.f32.mrb[0].mxu0
        %v1593 = vpop.f32.mrb[0].mxu0
        %1594 = vdwg.mxu0
        %v1595 = vsel %vm963, %v1541, 0.0
        %v1596 = vsel %vm963, %v1590, 0.0
        %v1597 = vadd.f32 %v1595, %v1596
        %v1598 = vld [vmem:[%s816] sm:$0x1]
        %v1600 = vlaneseq
        %v1601 = vshrl.u32 %v1600, 7
        %v1602 = vsub.s32 0, %v1601
        %v1603 = vrot.slane %v1598, %v1602
        %v1605 = vadd.f32 %v1597, %v1603
        %v1606 = vadd.f32 %v1605, %v883
        %v1607 = vld [vmem:[%s835] sm:$0x1]
        %v1608 = vld [vmem:[%s838] sm:$0x1]
        %v1609 = vsel %vm963, %v1606, 0.0
        %1610 = vadd.xlane.f32.xlu0 %v1609
        %v1611 = vpop.xlane.xlu0 %1610
        %v1612 = vrcp.pop 32.0
        %v1613 = vmul.f32 %v1611, %v1612
        %v1614 = vsub.f32 %v1606, %v1613
        %v1615 = vmul.f32 %v1614, %v1614
        %v1616 = vsel %vm963, %v1615, 0.0
        %1617 = vadd.xlane.f32.xlu0 %v1616
        %v1618 = vpop.xlane.xlu0 %1617
        %v1619 = vmul.f32 %v1618, %v1612
        %v1620 = vadd.f32 %v1619, 1e-12
        %v1621 = vrsqrt.pop %v1620
        %v1622 = vmul.f32 %v1614, %v1621
        %v1624 = vlaneseq
        %v1625 = vshrl.u32 %v1624, 7
        %v1626 = vsub.s32 0, %v1625
        %v1627 = vrot.slane %v1607, %v1626
        %v1629 = vmul.f32 %v1622, %v1627
        %v1631 = vlaneseq
        %v1632 = vshrl.u32 %v1631, 7
        %v1633 = vsub.s32 0, %v1632
        %v1634 = vrot.slane %v1608, %v1633
        %v1636 = vadd.f32 %v1629, %v1634
        %v1637 = vld [vmem:[%s821] sm:$0xf]
        %v1638 = vld [vmem:[%s821 + $0x4] sm:$0xf]
        %v1639 = vld [vmem:[%s821 + $0x8] sm:$0xf]
        %v1640 = vld [vmem:[%s821 + $0xc] sm:$0xf]
        %v1641 = vpack.c.bf16 %v1636, %v1636
        %v1642 = vld [vmem:[%s824] sm:$0x1]
        %v1644 = vlaneseq
        %v1645 = vshrl.u32 %v1644, 7
        %v1646 = vsub.s32 0, %v1645
        %v1647 = vrot.slane %v1642, %v1646
        %v1653 = vunpack.c.l.b16 %v1637
        %v1654 = vunpack.c.l.b16 %v1638
        %v1655 = vunpack.c.l.b16 %v1639
        %v1656 = vunpack.c.l.b16 %v1640
        %v1657 = vpack.c.b16 %v1654, %v1653
        %v1658 = vpack.c.b16 %v1656, %v1655
        %v1662 = vsel %vm963, %v1641, 0
        %1664 = vmatprep.subr.bf16.mxu0 0
        %1665 = vmatpush1.bf16.msra.mxu0 %v1657
        %1666 = vmatprep.subr.bf16.mxu0 0
        %1667 = vmatpush1.bf16.msra.mxu0 %v1658
        %1668 = vmatprep.subr.bf16.mxu0 0
        %1669 = vmatpush1.bf16.msra.mxu0 0
        %1670 = vmatprep.subr.bf16.mxu0 0
        %1671 = vmatpush1.bf16.msra.mxu0 0
        %1672 = vmatprep.subr.bf16.mxu0 0
        %1673 = vmatpush1.bf16.msra.mxu0 0
        %1674 = vmatprep.subr.bf16.mxu0 0
        %1675 = vmatpush1.bf16.msra.mxu0 0
        %1676 = vmatprep.subr.bf16.mxu0 0
        %1677 = vmatpush1.bf16.msra.mxu0 0
        %1678 = vmatprep.subr.bf16.mxu0 0
        %1679 = vmatpush1.bf16.msra.mxu0 0
        %1680 = vmatprep.subr.bf16.mxu0 0
        %1681 = vmatpush1.bf16.msra.mxu0 0
        %1682 = vmatprep.subr.bf16.mxu0 0
        %1683 = vmatpush1.bf16.msra.mxu0 0
        %1684 = vmatprep.subr.bf16.mxu0 0
        %1685 = vmatpush1.bf16.msra.mxu0 0
        %1686 = vmatprep.subr.bf16.mxu0 0
        %1687 = vmatpush1.bf16.msra.mxu0 0
        %1688 = vmatprep.subr.bf16.mxu0 0
        %1689 = vmatpush1.bf16.msra.mxu0 0
        %1690 = vmatprep.subr.bf16.mxu0 0
        %1691 = vmatpush1.bf16.msra.mxu0 0
        %1692 = vmatprep.subr.bf16.mxu0 0
        %1693 = vmatpush1.bf16.msra.mxu0 0
        %1694 = vmatprep.subr.bf16.mxu0 0
        %1695 = vmatpush1.bf16.msra.mxu0 0
        %1696 = vmatprep.mubr.bf16.mxu0 0
        %1697 = vmatmul.mubr.bf16.gmra.mrb[0].mxu0 %v1662
        %v1698 = vpop.f32.mrb[0].mxu0
        %v1699 = vadd.f32 %v1647, %v1698
        %v1700 = vpop.f32.mrb[0].mxu0
        %v1701 = vpop.f32.mrb[0].mxu0
        %v1702 = vpop.f32.mrb[0].mxu0
        %1703 = vdwg.mxu0
        %v1704 = vmul.f32 %v1699, %v1699
        %v1705 = vmul.f32 %v1699, %v1704
        %v1706 = vmul.f32 %v1705, 0.044715
        %v1707 = vadd.f32 %v1699, %v1706
        %v1708 = vmul.f32 %v1707, 0.7978846
        %v1709 = vtanh.pop %v1708
        %v1710 = vadd.f32 %v1709, 1.0
        %v1711 = vmul.f32 %v1710, 0.5
        %v1712 = vmul.f32 %v1699, %v1711
        %v1713 = vld [vmem:[%s829] sm:$0xf]
        %v1714 = vld [vmem:[%s829 + $0x4] sm:$0xf]
        %v1715 = vld [vmem:[%s829 + $0x8] sm:$0xf]
        %v1716 = vld [vmem:[%s829 + $0xc] sm:$0xf]
        %v1717 = vld [vmem:[%s829 + $0x10] sm:$0xf]
        %v1718 = vld [vmem:[%s829 + $0x14] sm:$0xf]
        %v1719 = vld [vmem:[%s829 + $0x18] sm:$0xf]
        %v1720 = vld [vmem:[%s829 + $0x1c] sm:$0xf]
        %v1721 = vpack.c.bf16 %v1712, %v1712
        %v1722 = vld [vmem:[%s832] sm:$0x1]
        %v1724 = vlaneseq
        %v1725 = vshrl.u32 %v1724, 7
        %v1726 = vsub.s32 0, %v1725
        %v1727 = vrot.slane %v1722, %v1726
        %v1737 = vunpack.c.l.b16 %v1713
        %v1738 = vunpack.c.l.b16 %v1714
        %v1739 = vunpack.c.l.b16 %v1715
        %v1740 = vunpack.c.l.b16 %v1716
        %v1741 = vunpack.c.l.b16 %v1717
        %v1742 = vunpack.c.l.b16 %v1718
        %v1743 = vunpack.c.l.b16 %v1719
        %v1744 = vunpack.c.l.b16 %v1720
        %v1745 = vpack.c.b16 %v1738, %v1737
        %v1746 = vpack.c.b16 %v1740, %v1739
        %v1747 = vpack.c.b16 %v1742, %v1741
        %v1748 = vpack.c.b16 %v1744, %v1743
        %vm1753 = vcmask 523264
        %v1755 = vsel %vm1753, %v1721, 0
        %1757 = vmatprep.subr.bf16.mxu0 0
        %1758 = vmatpush1.bf16.msra.mxu0 %v1745
        %1759 = vmatprep.subr.bf16.mxu0 0
        %1760 = vmatpush1.bf16.msra.mxu0 %v1746
        %1761 = vmatprep.subr.bf16.mxu0 0
        %1762 = vmatpush1.bf16.msra.mxu0 %v1747
        %1763 = vmatprep.subr.bf16.mxu0 0
        %1764 = vmatpush1.bf16.msra.mxu0 %v1748
        %1765 = vmatprep.subr.bf16.mxu0 0
        %1766 = vmatpush1.bf16.msra.mxu0 0
        %1767 = vmatprep.subr.bf16.mxu0 0
        %1768 = vmatpush1.bf16.msra.mxu0 0
        %1769 = vmatprep.subr.bf16.mxu0 0
        %1770 = vmatpush1.bf16.msra.mxu0 0
        %1771 = vmatprep.subr.bf16.mxu0 0
        %1772 = vmatpush1.bf16.msra.mxu0 0
        %1773 = vmatprep.subr.bf16.mxu0 0
        %1774 = vmatpush1.bf16.msra.mxu0 0
        %1775 = vmatprep.subr.bf16.mxu0 0
        %1776 = vmatpush1.bf16.msra.mxu0 0
        %1777 = vmatprep.subr.bf16.mxu0 0
        %1778 = vmatpush1.bf16.msra.mxu0 0
        %1779 = vmatprep.subr.bf16.mxu0 0
        %1780 = vmatpush1.bf16.msra.mxu0 0
        %1781 = vmatprep.subr.bf16.mxu0 0
        %1782 = vmatpush1.bf16.msra.mxu0 0
        %1783 = vmatprep.subr.bf16.mxu0 0
        %1784 = vmatpush1.bf16.msra.mxu0 0
        %1785 = vmatprep.subr.bf16.mxu0 0
        %1786 = vmatpush1.bf16.msra.mxu0 0
        %1787 = vmatprep.subr.bf16.mxu0 0
        %1788 = vmatpush1.bf16.msra.mxu0 0
        %1789 = vmatprep.mubr.bf16.mxu0 0
        %1790 = vmatmul.mubr.bf16.gmra.mrb[0].mxu0 %v1755
        %v1791 = vpop.f32.mrb[0].mxu0
        %v1792 = vadd.f32 %v1727, %v1791
        %v1793 = vpop.f32.mrb[0].mxu0
        %v1794 = vpop.f32.mrb[0].mxu0
        %v1795 = vpop.f32.mrb[0].mxu0
        %1796 = vdwg.mxu0
        %v1797 = vadd.f32 %v1792, %v1636
        %v1798 = vld [vmem:[%s841] sm:$0x1]
        %v1799 = vld [vmem:[%s844] sm:$0x1]
        %v1800 = vsel %vm963, %v1797, 0.0
        %1801 = vadd.xlane.f32.xlu0 %v1800
        %v1802 = vpop.xlane.xlu0 %1801
        %v1803 = vmul.f32 %v1802, %v1612
        %v1804 = vsub.f32 %v1797, %v1803
        %v1805 = vmul.f32 %v1804, %v1804
        %v1806 = vsel %vm963, %v1805, 0.0
        %1807 = vadd.xlane.f32.xlu0 %v1806
        %v1808 = vpop.xlane.xlu0 %1807
        %v1809 = vmul.f32 %v1808, %v1612
        %v1810 = vadd.f32 %v1809, 1e-12
        %v1811 = vrsqrt.pop %v1810
        %v1812 = vmul.f32 %v1804, %v1811
        %v1814 = vlaneseq
        %v1815 = vshrl.u32 %v1814, 7
        %v1816 = vsub.s32 0, %v1815
        %v1817 = vrot.slane %v1798, %v1816
        %v1819 = vmul.f32 %v1812, %v1817
        %v1821 = vlaneseq
        %v1822 = vshrl.u32 %v1821, 7
        %v1823 = vsub.s32 0, %v1822
        %v1824 = vrot.slane %v1799, %v1823
        %v1826 = vadd.f32 %v1819, %v1824
        %1827 = vst.msk [vmem:[#allocation2] sm:$0xff] %vm963, %v1826
        %p1828 = scmp.eq.s32.totalorder %s39, 1
        // Predicated region
        $region105: #{bert_ml_clf2_forward.1} parent=99 // pred_check
          %p1829 = pneg %p1828
        $region106: #{bert_ml_clf2_forward.1} parent=99 // pred_check_branch
          %1831 = sbr.rel (%p1829) target = $region108
        $region107: #{bert_ml_clf2_forward.1} parent=99 // pred_region
          %v1832 = vld [vmem:[%s16] sm:$0xf]
          %v1833 = vld [vmem:[%s16 + $0x4] sm:$0xf]
          %v1834 = vld [vmem:[%s16 + $0x8] sm:$0xf]
          %v1835 = vld [vmem:[%s16 + $0xc] sm:$0xf]
          %v1836 = vpack.c.bf16 %v1826, %v1826
          %v1837 = vld [vmem:[%s17] sm:$0x1]
          %v1842 = vunpack.c.l.b16 %v1832
          %v1843 = vunpack.c.l.b16 %v1833
          %v1844 = vunpack.c.l.b16 %v1834
          %v1845 = vunpack.c.l.b16 %v1835
          %v1846 = vpack.c.b16 %v1843, %v1842
          %v1847 = vpack.c.b16 %v1845, %v1844
          %v1851 = vsel %vm963, %v1836, 0
          %1853 = vmatprep.subr.bf16.mxu0 0
          %1854 = vmatpush1.bf16.msra.mxu0 %v1846
          %1855 = vmatprep.subr.bf16.mxu0 0
          %1856 = vmatpush1.bf16.msra.mxu0 %v1847
          %1857 = vmatprep.subr.bf16.mxu0 0
          %1858 = vmatpush1.bf16.msra.mxu0 0
          %1859 = vmatprep.subr.bf16.mxu0 0
          %1860 = vmatpush1.bf16.msra.mxu0 0
          %1861 = vmatprep.subr.bf16.mxu0 0
          %1862 = vmatpush1.bf16.msra.mxu0 0
          %1863 = vmatprep.subr.bf16.mxu0 0
          %1864 = vmatpush1.bf16.msra.mxu0 0
          %1865 = vmatprep.subr.bf16.mxu0 0
          %1866 = vmatpush1.bf16.msra.mxu0 0
          %1867 = vmatprep.subr.bf16.mxu0 0
          %1868 = vmatpush1.bf16.msra.mxu0 0
          %1869 = vmatprep.subr.bf16.mxu0 0
          %1870 = vmatpush1.bf16.msra.mxu0 0
          %1871 = vmatprep.subr.bf16.mxu0 0
          %1872 = vmatpush1.bf16.msra.mxu0 0
          %1873 = vmatprep.subr.bf16.mxu0 0
          %1874 = vmatpush1.bf16.msra.mxu0 0
          %1875 = vmatprep.subr.bf16.mxu0 0
          %1876 = vmatpush1.bf16.msra.mxu0 0
          %1877 = vmatprep.subr.bf16.mxu0 0
          %1878 = vmatpush1.bf16.msra.mxu0 0
          %1879 = vmatprep.subr.bf16.mxu0 0
          %1880 = vmatpush1.bf16.msra.mxu0 0
          %1881 = vmatprep.subr.bf16.mxu0 0
          %1882 = vmatpush1.bf16.msra.mxu0 0
          %1883 = vmatprep.subr.bf16.mxu0 0
          %1884 = vmatpush1.bf16.msra.mxu0 0
          %1885 = vmatprep.mubr.bf16.mxu0 0
          %1886 = vmatmul.mubr.bf16.gmra.mrb[0].mxu0 %v1851
          %v1887 = vpop.f32.mrb[0].mxu0
          %v1888 = vadd.f32 %v1837, %v1887
          %v1889 = vpop.f32.mrb[0].mxu0
          %v1890 = vpop.f32.mrb[0].mxu0
          %v1891 = vpop.f32.mrb[0].mxu0
          %1892 = vdwg.mxu0
          %v1893 = vtanh.pop %v1888
          %v1894 = vld [vmem:[%s18] sm:$0xf]
          %v1895 = vld [vmem:[%s18 + $0x4] sm:$0xf]
          %v1896 = vld [vmem:[%s18 + $0x8] sm:$0xf]
          %v1897 = vld [vmem:[%s18 + $0xc] sm:$0xf]
          %v1898 = vpack.c.bf16 %v1893, %v1893
          %v1899 = vld [vmem:[%s19] sm:$0x1]
          %v1904 = vunpack.c.l.b16 %v1894
          %v1905 = vunpack.c.l.b16 %v1895
          %v1906 = vunpack.c.l.b16 %v1896
          %v1907 = vunpack.c.l.b16 %v1897
          %v1908 = vpack.c.b16 %v1905, %v1904
          %v1909 = vpack.c.b16 %v1907, %v1906
          %v1913 = vsel %vm963, %v1898, 0
          %1915 = vmatprep.subr.bf16.mxu0 0
          %1916 = vmatpush1.bf16.msra.mxu0 %v1908
          %1917 = vmatprep.subr.bf16.mxu0 0
          %1918 = vmatpush1.bf16.msra.mxu0 %v1909
          %1919 = vmatprep.subr.bf16.mxu0 0
          %1920 = vmatpush1.bf16.msra.mxu0 0
          %1921 = vmatprep.subr.bf16.mxu0 0
          %1922 = vmatpush1.bf16.msra.mxu0 0
          %1923 = vmatprep.subr.bf16.mxu0 0
          %1924 = vmatpush1.bf16.msra.mxu0 0
          %1925 = vmatprep.subr.bf16.mxu0 0
          %1926 = vmatpush1.bf16.msra.mxu0 0
          %1927 = vmatprep.subr.bf16.mxu0 0
          %1928 = vmatpush1.bf16.msra.mxu0 0
          %1929 = vmatprep.subr.bf16.mxu0 0
          %1930 = vmatpush1.bf16.msra.mxu0 0
          %1931 = vmatprep.subr.bf16.mxu0 0
          %1932 = vmatpush1.bf16.msra.mxu0 0
          %1933 = vmatprep.subr.bf16.mxu0 0
          %1934 = vmatpush1.bf16.msra.mxu0 0
          %1935 = vmatprep.subr.bf16.mxu0 0
          %1936 = vmatpush1.bf16.msra.mxu0 0
          %1937 = vmatprep.subr.bf16.mxu0 0
          %1938 = vmatpush1.bf16.msra.mxu0 0
          %1939 = vmatprep.subr.bf16.mxu0 0
          %1940 = vmatpush1.bf16.msra.mxu0 0
          %1941 = vmatprep.subr.bf16.mxu0 0
          %1942 = vmatpush1.bf16.msra.mxu0 0
          %1943 = vmatprep.subr.bf16.mxu0 0
          %1944 = vmatpush1.bf16.msra.mxu0 0
          %1945 = vmatprep.subr.bf16.mxu0 0
          %1946 = vmatpush1.bf16.msra.mxu0 0
          %1947 = vmatprep.mubr.bf16.mxu0 0
          %1948 = vmatmul.mubr.bf16.gmra.mrb[0].mxu0 %v1913
          %v1949 = vpop.f32.mrb[0].mxu0
          %v1950 = vadd.f32 %v1899, %v1949
          %v1951 = vpop.f32.mrb[0].mxu0
          %v1952 = vpop.f32.mrb[0].mxu0
          %v1953 = vpop.f32.mrb[0].mxu0
          %1954 = vdwg.mxu0
          %1955 = vst [vmem:[%s792] sm:$0x1] %v1950
        $region108: #{bert_ml_clf2_forward.1} parent=99 // pred_fallthru
          _
        %s1956 = sand.u32 %s544, 1
        %s1957 = scalar_lea.sflag [#allocation4], %s1956
        %s1958 = sand.u32 %s544, 1
        %s1959 = scalar_lea.vmem [#allocation3], %s1958
        // Predicated region
        $region109: #{bert_ml_clf2_forward.1} parent=99 // pred_check
          %p1960 = pneg %p554
        $region110: #{bert_ml_clf2_forward.1} parent=99 // pred_check_branch
          %1962 = sbr.rel (%p1960) target = $region112
        $region111: #{bert_ml_clf2_forward.1} parent=99 // pred_region
          %s1964 = ssub.s32 16, 16
          %1965 = vsyncadd %s1957, %s1964
          %s1966 = smul.addr %s38, 16
          %s1967 = scalar_lea.hbm %s20, %s1966
          %s1969 = sshll.u32 %s1959, 4
          %s1970 = int_to_ptr.vmem [resolvable:$true] %s1969
          %1972 = dma.vmem_to_hbm [thread:$0]  %s1970, 16, %s1967, %s1957
        $region112: #{bert_ml_clf2_forward.1} parent=99 // pred_fallthru
          _
      $region100: #{bert_ml_clf2_forward.1} parent=5 // pred_fallthru
        _
      %p1973 = scmp.le.s32.totalorder 2, %s29
      // Predicated region
      $region113: #{bert_ml_clf2_forward.1} parent=5 // pred_check
        %p1974 = pneg %p1973
      $region114: #{bert_ml_clf2_forward.1} parent=5 // pred_check_branch
        %1976 = sbr.rel (%p1974) target = $region116
      $region115: #{bert_ml_clf2_forward.1} parent=5 // pred_region
        %s1977 = ssub.s32 %s29, 2
        // Predicated region
        $region117: #{bert_ml_clf2_forward.1} parent=115 // pred_check
          %p1978 = pneg %p560
        $region118: #{bert_ml_clf2_forward.1} parent=115 // pred_check_branch
          %1980 = sbr.rel (%p1978) target = $region120
        $region119: #{bert_ml_clf2_forward.1} parent=115 // pred_region
          %s1981 = sand.u32 %s545, 1
          %s1982 = scalar_lea.sflag [#allocation4], %s1981
          %s1983 = sand.u32 %s545, 1
          %s1984 = scalar_lea.vmem [#allocation3], %s1983
          %1985 = dma.done %s1982, 16
        $region120: #{bert_ml_clf2_forward.1} parent=115 // pred_fallthru
          _
      $region116: #{bert_ml_clf2_forward.1} parent=5 // pred_fallthru
        _
    $region6: #{bert_ml_clf2_forward.1} parent=1 // loop_footer
      %s33 = sadd.s32 1, %s29
    $region7: #{bert_ml_clf2_forward.1} parent=1 // loop_footer_branch
      %28 = sbr.rel target = $region3
    $region8: #{bert_ml_clf2_forward.1} parent=1 // loop_exit
      _
    %1986 = vsyncpa [#allocation4], 1
    %s1987 = scalar_lea.sflag [#allocation4], 1
    %1988 = vsyncpa %s1987, 1

</llo_original>
